<compile_context>
chip_gen: v7x
topology: tpu7x:2x2x1
jax: 0.10.0
libtpu: 0.0.40
codegen_flags: <defaults>
</compile_context>

<pallas_src>
import jax
import jax.numpy as jnp
from jax import lax
from jax.experimental import pallas as pl
from jax.experimental.pallas import tpu as pltpu

LRELU_SLOPE = 0.1


def get_padding(kernel_size, dilation=1):
    return int((kernel_size * dilation - dilation) / 2)


def _leaky_relu(x):
    return jnp.where(x > 0, x, LRELU_SLOPE * x)


def _vmem_budget_bytes():
    """Generation-aware VMEM budget: ~half of physical, capped at 64 MiB."""
    cap = 64 * 1024 * 1024          # conservative fallback (v7x physical)
    try:
        cap = int(pltpu.get_tpu_info().vmem_capacity_bytes)
    except Exception:
        pass
    return min(cap // 2, 64 * 1024 * 1024)


def _choose_t_tile(B, C, T, budget_bytes):
    """Largest T tile that (a) divides T, (b) fits the VMEM budget and
    (c) preferably leaves >= 2 parallel grid steps (v7x has 2 TensorCores)."""
    bytes_per_ct = 64   # conservative per-(C*TT)-element VMEM cost estimate
    fitting = [tt for tt in (4096, 2048, 1024, 512, 256, 128)
               if T % tt == 0 and C * tt * bytes_per_ct <= budget_bytes]
    for tt in fitting:
        if B * (T // tt) >= 2:
            return tt
    return fitting[0] if fitting else T   # tiny T: single un-tiled block


def _make_fused_kernel(T, TT, K, d1, d2, pad1, pad2, mxu_dtype):
    """Fused: lrelu -> conv(d1) -> +res -> lrelu -> conv(d2) -> +res."""
    H = pad1 + pad2          # halo per side for the fused receptive field
    W1 = TT + 2 * pad2       # width of the layer-1 output window conv2 needs

    def kernel(x_ref, h_ref, w1_ref, b1_ref, w2_ref, b2_ref, o_ref):
        t0 = pl.program_id(0) * TT

        center = x_ref[0].astype(jnp.float32)        # (C, TT)   current tile
        halo = h_ref[0, 0].astype(jnp.float32)       # (C, 2H)   [left | right]
        # In-kernel "same" padding / halo assembly (no full-tensor pad pass).
        xp = jnp.concatenate([halo[:, :H], center, halo[:, H:]], axis=-1)

        # ---------- layer 1: leaky_relu -> conv(dil=d1), fused taps ----------
        xt = _leaky_relu(xp)
        if mxu_dtype is not None:
            xt = xt.astype(mxu_dtype)                # cast once, before im2col
        x1 = jnp.concatenate([xt[:, k * d1:k * d1 + W1] for k in range(K)],
                             axis=0)                 # (K*C, W1) im2col operand
        # Residual + bias folded into the accumulator init, one MXU matmul.
        y1 = xp[:, pad1:pad1 + W1] + b1_ref[...].astype(jnp.float32)
        y1 = y1 + jnp.dot(w1_ref[...], x1, preferred_element_type=jnp.float32)

        # conv2 zero-pads the *layer-1 output*: halo columns that map outside
        # [0, T) must be exactly zero.  Lane-only iota, broadcast select.
        gpos = t0 - pad2 + lax.broadcasted_iota(jnp.int32, (1, W1), 1)
        y1 = jnp.where((gpos >= 0) & (gpos < T), y1, 0.0)

        # ---------- layer 2: leaky_relu -> conv(dil=d2), fused taps ----------
        zt = _leaky_relu(y1)
        if mxu_dtype is not None:
            zt = zt.astype(mxu_dtype)
        x2 = jnp.concatenate([zt[:, k * d2:k * d2 + TT] for k in range(K)],
                             axis=0)                 # (K*C, TT) im2col operand
        out = y1[:, pad2:pad2 + TT] + b2_ref[...].astype(jnp.float32)
        out = out + jnp.dot(w2_ref[...], x2, preferred_element_type=jnp.float32)

        o_ref[0] = out.astype(o_ref.dtype)           # lane-dense (C, TT) store

    return kernel


def resblock2_forward(x, params, dilations=(1, 3), t_tile=None,
                      mxu_dtype=jnp.bfloat16):
    """ResBlock2.forward. x: (B, C, T), the PyTorch Conv1d NCT layout."""
    B, C, T = x.shape
    (w1, b1), (w2, b2) = params
    K = w1.shape[-1]
    d1, d2 = dilations
    pad1 = get_padding(K, d1)
    pad2 = get_padding(K, d2)
    H = pad1 + pad2

    budget = _vmem_budget_bytes()
    TT = t_tile if t_tile is not None else _choose_t_tile(B, C, T, budget)
    # TODO(synk): ragged T (not a multiple of the chosen tile) is unsupported.
    assert T % TT == 0 and TT > H, (T, TT, H)
    num_t = T // TT

    # Vectorized halo construction (O(1) XLA ops): (B, num_t, C, 2H) holding
    # the H left / H right neighbour columns of every T tile (zeros at edges).
    xr = x.reshape(B, C, num_t, TT)
    zed = jnp.zeros((B, C, 1, H), x.dtype)
    left = jnp.concatenate([zed, xr[:, :, :-1, TT - H:]], axis=2)
    right = jnp.concatenate([xr[:, :, 1:, :H], zed], axis=2)
    halos = jnp.transpose(jnp.concatenate([left, right], axis=-1), (0, 2, 1, 3))

    # Weights (C_out, C_in, K) -> (C_out, K*C_in) so each layer is a single
    # matmul against the (K*C_in, width) im2col operand; cast once to the MXU
    # operand dtype here (bf16 by default).  Biases stay f32 (accumulator add).
    def stack_w(w):
        ws = jnp.transpose(w, (0, 2, 1)).reshape(C, K * C)
        return ws if mxu_dtype is None else ws.astype(mxu_dtype)

    w1_s, w2_s = stack_w(w1), stack_w(w2)
    b1_c = b1.reshape(C, 1).astype(jnp.float32)
    b2_c = b2.reshape(C, 1).astype(jnp.float32)

    kernel = _make_fused_kernel(T, TT, K, d1, d2, pad1, pad2, mxu_dtype)

    def build(single_buffer_consts):
        const_kw = ({"pipeline_mode": pl.Buffered(1)}
                    if single_buffer_consts else {})
        return pl.pallas_call(
            kernel,
            out_shape=jax.ShapeDtypeStruct((B, C, T), x.dtype),
            grid=(num_t, B),
            in_specs=[
                pl.BlockSpec((1, C, TT), lambda t, b: (b, 0, t)),           # x
                pl.BlockSpec((1, 1, C, 2 * H), lambda t, b: (b, t, 0, 0)),  # halos
                pl.BlockSpec((C, K * C), lambda t, b: (0, 0), **const_kw),  # w1
                pl.BlockSpec((C, 1), lambda t, b: (0, 0), **const_kw),      # b1
                pl.BlockSpec((C, K * C), lambda t, b: (0, 0), **const_kw),  # w2
                pl.BlockSpec((C, 1), lambda t, b: (0, 0), **const_kw),      # b2
            ],
            out_specs=pl.BlockSpec((1, C, TT), lambda t, b: (b, 0, t)),
            compiler_params=pltpu.CompilerParams(
                dimension_semantics=("parallel", "parallel"),
                vmem_limit_bytes=budget,
            ),
        )

    args = (x, halos, w1_s, b1_c, w2_s, b2_c)
    try:
        return build(True)(*args)
    except Exception:
        # Fallback if pipeline_mode=pl.Buffered(1) is unsupported in this JAX.
        return build(False)(*args)


def resblock2_ref(x, params, dilations=(1, 3)):
    """Pure-JAX reference (lax conv) for correctness checking."""
    for (w, b), d in zip(params, dilations):
        xt = jnp.where(x > 0, x, LRELU_SLOPE * x)
        pad = get_padding(w.shape[-1], d)
        y = lax.conv_general_dilated(
            xt, w, window_strides=(1,), padding=[(pad, pad)],
            rhs_dilation=(d,), dimension_numbers=("NCH", "OIH", "NCH"))
        x = y + b[None, :, None] + x
    return x


if __name__ == "__main__":
    # Small shapes consistent with Conv1d(channels, channels, 3): B=2, C=4, T=16
    B, C, T, K = 2, 4, 16, 3
    dilations = (1, 3)

    key = jax.random.PRNGKey(0)
    k1, k2, k3, k4, k5 = jax.random.split(key, 5)
    x = jax.random.normal(k1, (B, C, T), jnp.float32)

    # Deterministic synthetic parameters (weight_norm at init reproduces the
    # underlying weight exactly, so one dense weight per conv suffices).
    params = [
        (0.01 * jax.random.normal(k2, (C, C, K), jnp.float32),
         0.01 * jax.random.normal(k3, (C,), jnp.float32)),
        (0.01 * jax.random.normal(k4, (C, C, K), jnp.float32),
         0.01 * jax.random.normal(k5, (C,), jnp.float32)),
    ]

    ref = resblock2_ref(x, params, dilations)

    # 1) Exact path (f32 MXU operands) at the toy shape (single T tile).
    out_f32 = jax.block_until_ready(
        resblock2_forward(x, params, dilations, mxu_dtype=None))
    assert out_f32.shape == (B, C, T), out_f32.shape
    assert jnp.allclose(out_f32, ref, atol=1e-5, rtol=1e-5), \
        float(jnp.max(jnp.abs(out_f32 - ref)))

    # 2) Default path (bf16 MXU operands, f32 accumulation / elementwise).
    out_bf16 = jax.block_until_ready(resblock2_forward(x, params, dilations))
    assert jnp.allclose(out_bf16, ref, atol=2e-2, rtol=2e-2), \
        float(jnp.max(jnp.abs(out_bf16 - ref)))

    # 3) Tiled-T path (multiple tiles + real cross-tile halos), exact operands.
    T2 = 256
    x2 = jax.random.normal(jax.random.PRNGKey(1), (B, C, T2), jnp.float32)
    ref2 = resblock2_ref(x2, params, dilations)
    out2 = jax.block_until_ready(
        resblock2_forward(x2, params, dilations, t_tile=128, mxu_dtype=None))
    assert jnp.allclose(out2, ref2, atol=1e-5, rtol=1e-5), \
        float(jnp.max(jnp.abs(out2 - ref2)))

    # 4) Tiled-T path with the defaults (auto tile choice + bf16 operands).
    out3 = jax.block_until_ready(resblock2_forward(x2, params, dilations))
    assert jnp.allclose(out3, ref2, atol=2e-2, rtol=2e-2), \
        float(jnp.max(jnp.abs(out3 - ref2)))

    print("KERNEL_OK")
</pallas_src>

<mosaic_0001>
module attributes {stable_mosaic.version = 11 : i64} {
  func.func @kernel(%arg0: i32, %arg1: i32, %arg2: memref<1x4x16xf32, #tpu.memory_space<vmem>>, %arg3: memref<1x1x4x8xf32, #tpu.memory_space<vmem>>, %arg4: memref<4x12xf32, #tpu.memory_space<vmem>>, %arg5: memref<4x1xf32, #tpu.memory_space<vmem>>, %arg6: memref<4x12xf32, #tpu.memory_space<vmem>>, %arg7: memref<4x1xf32, #tpu.memory_space<vmem>>, %arg8: memref<1x4x16xf32, #tpu.memory_space<vmem>>) attributes {dimension_semantics = [#tpu.dimension_semantics<parallel>, #tpu.dimension_semantics<parallel>], iteration_bounds = array<i64: 1, 2>, scalar_prefetch = 0 : i64, scratch_operands = 0 : i64, tpu.core_type = #tpu.core_type<tc>, window_params = [{transform_indices = @transform_0, window_bounds = array<i64: 1, 4, 16>}, {transform_indices = @transform_1, window_bounds = array<i64: 1, 1, 4, 8>}, {pipeline_mode = #tpu.pipeline_mode<synchronous>, transform_indices = @transform_2, window_bounds = array<i64: 4, 12>}, {pipeline_mode = #tpu.pipeline_mode<synchronous>, transform_indices = @transform_3, window_bounds = array<i64: 4, 1>}, {pipeline_mode = #tpu.pipeline_mode<synchronous>, transform_indices = @transform_4, window_bounds = array<i64: 4, 12>}, {pipeline_mode = #tpu.pipeline_mode<synchronous>, transform_indices = @transform_5, window_bounds = array<i64: 4, 1>}, {transform_indices = @transform_6, window_bounds = array<i64: 1, 4, 16>}]} {
    %c16_i32 = arith.constant 16 : i32
    %0 = arith.muli %arg0, %c16_i32 : i32
    %c0 = arith.constant 0 : index
    %c0_0 = arith.constant 0 : index
    %c0_1 = arith.constant 0 : index
    %1 = vector.load %arg2[%c0, %c0_0, %c0_1] : memref<1x4x16xf32, #tpu.memory_space<vmem>>, vector<1x4x16xf32>
    %2 = vector.shape_cast %1 : vector<1x4x16xf32> to vector<4x16xf32>
    %c0_2 = arith.constant 0 : index
    %c0_3 = arith.constant 0 : index
    %c0_4 = arith.constant 0 : index
    %c0_5 = arith.constant 0 : index
    %3 = vector.load %arg3[%c0_2, %c0_3, %c0_4, %c0_5] : memref<1x1x4x8xf32, #tpu.memory_space<vmem>>, vector<1x1x4x8xf32>
    %4 = vector.shape_cast %3 : vector<1x1x4x8xf32> to vector<4x8xf32>
    %5 = vector.extract_strided_slice %4 {offsets = [0, 0], sizes = [4, 4], strides = [1, 1]} : vector<4x8xf32> to vector<4x4xf32>
    %6 = vector.extract_strided_slice %4 {offsets = [0, 4], sizes = [4, 4], strides = [1, 1]} : vector<4x8xf32> to vector<4x4xf32>
    %7 = tpu.concatenate %5, %2, %6 in 1 : vector<4x4xf32>, vector<4x16xf32>, vector<4x4xf32> -> vector<4x24xf32>
    %cst = arith.constant 0.000000e+00 : f32
    %8 = vector.broadcast %cst : f32 to vector<4x24xf32>
    %9 = arith.cmpf ogt, %7, %8 : vector<4x24xf32>
    %cst_6 = arith.constant 1.000000e-01 : f32
    %10 = vector.broadcast %cst_6 : f32 to vector<4x24xf32>
    %11 = arith.mulf %10, %7 : vector<4x24xf32>
    %12 = arith.select %9, %7, %11 : vector<4x24xi1>, vector<4x24xf32>
    %13 = vector.extract_strided_slice %12 {offsets = [0, 0], sizes = [4, 22], strides = [1, 1]} : vector<4x24xf32> to vector<4x22xf32>
    %14 = vector.extract_strided_slice %12 {offsets = [0, 1], sizes = [4, 22], strides = [1, 1]} : vector<4x24xf32> to vector<4x22xf32>
    %15 = vector.extract_strided_slice %12 {offsets = [0, 2], sizes = [4, 22], strides = [1, 1]} : vector<4x24xf32> to vector<4x22xf32>
    %16 = tpu.concatenate %13, %14, %15 in 0 : vector<4x22xf32>, vector<4x22xf32>, vector<4x22xf32> -> vector<12x22xf32>
    %17 = vector.extract_strided_slice %7 {offsets = [0, 1], sizes = [4, 22], strides = [1, 1]} : vector<4x24xf32> to vector<4x22xf32>
    %c0_7 = arith.constant 0 : index
    %c0_8 = arith.constant 0 : index
    %18 = vector.load %arg5[%c0_7, %c0_8] : memref<4x1xf32, #tpu.memory_space<vmem>>, vector<4x1xf32>
    %19 = vector.broadcast %18 : vector<4x1xf32> to vector<4x22xf32>
    %20 = arith.addf %17, %19 : vector<4x22xf32>
    %c0_9 = arith.constant 0 : index
    %c0_10 = arith.constant 0 : index
    %21 = vector.load %arg4[%c0_9, %c0_10] : memref<4x12xf32, #tpu.memory_space<vmem>>, vector<4x12xf32>
    %cst_11 = arith.constant dense<0.000000e+00> : vector<4x22xf32>
    %22 = tpu.matmul %21, %16, %cst_11 {dimension_numbers = #tpu.dot_dimension_numbers<[1], [0], [0], [1], [0, 0, 1, 1], [], []>} : vector<4x12xf32>, vector<12x22xf32>, vector<4x22xf32> -> vector<4x22xf32>
    %23 = arith.addf %20, %22 : vector<4x22xf32>
    %c3_i32 = arith.constant 3 : i32
    %24 = arith.subi %0, %c3_i32 : i32
    %25 = tpu.iota {dimensions = array<i32: 1>} : vector<1x22xi32>
    %26 = vector.broadcast %24 : i32 to vector<1x22xi32>
    %27 = arith.addi %26, %25 : vector<1x22xi32>
    %c0_i32 = arith.constant 0 : i32
    %28 = vector.broadcast %c0_i32 : i32 to vector<1x22xi32>
    %29 = arith.cmpi sge, %27, %28 : vector<1x22xi32>
    %c16_i32_12 = arith.constant 16 : i32
    %30 = vector.broadcast %c16_i32_12 : i32 to vector<1x22xi32>
    %31 = arith.cmpi slt, %27, %30 : vector<1x22xi32>
    %32 = arith.andi %29, %31 : vector<1x22xi1>
    %cst_13 = arith.constant 0.000000e+00 : f32
    %33 = vector.shape_cast %32 : vector<1x22xi1> to vector<1x22xi1>
    %34 = vector.broadcast %33 : vector<1x22xi1> to vector<4x22xi1>
    %35 = vector.broadcast %cst_13 : f32 to vector<4x22xf32>
    %36 = arith.select %34, %23, %35 : vector<4x22xi1>, vector<4x22xf32>
    %cst_14 = arith.constant 0.000000e+00 : f32
    %37 = vector.broadcast %cst_14 : f32 to vector<4x22xf32>
    %38 = arith.cmpf ogt, %36, %37 : vector<4x22xf32>
    %cst_15 = arith.constant 1.000000e-01 : f32
    %39 = vector.broadcast %cst_15 : f32 to vector<4x22xf32>
    %40 = arith.mulf %39, %36 : vector<4x22xf32>
    %41 = arith.select %38, %36, %40 : vector<4x22xi1>, vector<4x22xf32>
    %42 = vector.extract_strided_slice %41 {offsets = [0, 0], sizes = [4, 16], strides = [1, 1]} : vector<4x22xf32> to vector<4x16xf32>
    %43 = vector.extract_strided_slice %41 {offsets = [0, 3], sizes = [4, 16], strides = [1, 1]} : vector<4x22xf32> to vector<4x16xf32>
    %44 = vector.extract_strided_slice %41 {offsets = [0, 6], sizes = [4, 16], strides = [1, 1]} : vector<4x22xf32> to vector<4x16xf32>
    %45 = tpu.concatenate %42, %43, %44 in 0 : vector<4x16xf32>, vector<4x16xf32>, vector<4x16xf32> -> vector<12x16xf32>
    %46 = vector.extract_strided_slice %36 {offsets = [0, 3], sizes = [4, 16], strides = [1, 1]} : vector<4x22xf32> to vector<4x16xf32>
    %c0_16 = arith.constant 0 : index
    %c0_17 = arith.constant 0 : index
    %47 = vector.load %arg7[%c0_16, %c0_17] : memref<4x1xf32, #tpu.memory_space<vmem>>, vector<4x1xf32>
    %48 = vector.broadcast %47 : vector<4x1xf32> to vector<4x16xf32>
    %49 = arith.addf %46, %48 : vector<4x16xf32>
    %c0_18 = arith.constant 0 : index
    %c0_19 = arith.constant 0 : index
    %50 = vector.load %arg6[%c0_18, %c0_19] : memref<4x12xf32, #tpu.memory_space<vmem>>, vector<4x12xf32>
    %cst_20 = arith.constant dense<0.000000e+00> : vector<4x16xf32>
    %51 = tpu.matmul %50, %45, %cst_20 {dimension_numbers = #tpu.dot_dimension_numbers<[1], [0], [0], [1], [0, 0, 1, 1], [], []>} : vector<4x12xf32>, vector<12x16xf32>, vector<4x16xf32> -> vector<4x16xf32>
    %52 = arith.addf %49, %51 : vector<4x16xf32>
    %c0_21 = arith.constant 0 : index
    %c0_22 = arith.constant 0 : index
    %c0_23 = arith.constant 0 : index
    %53 = vector.load %arg8[%c0_21, %c0_22, %c0_23] : memref<1x4x16xf32, #tpu.memory_space<vmem>>, vector<1x4x16xf32>
    %54 = vector.shape_cast %53 : vector<1x4x16xf32> to vector<4x16xf32>
    %55 = vector.shape_cast %52 : vector<4x16xf32> to vector<1x4x16xf32>
    tpu.vector_store %arg8[%c0_21, %c0_22, %c0_23], %55 {strides = array<i32>} : memref<1x4x16xf32, #tpu.memory_space<vmem>>, vector<1x4x16xf32>,
    return
  }
  func.func @transform_0(%arg0: i32, %arg1: i32) -> (i32, i32, i32) {
    %c0_i32 = arith.constant 0 : i32
    %c0_i32_0 = arith.constant 0 : i32
    return %arg1, %c0_i32, %arg0 : i32, i32, i32
  }
  func.func @transform_1(%arg0: i32, %arg1: i32) -> (i32, i32, i32, i32) {
    %c0_i32 = arith.constant 0 : i32
    %c0_i32_0 = arith.constant 0 : i32
    %c0_i32_1 = arith.constant 0 : i32
    return %arg1, %arg0, %c0_i32, %c0_i32_0 : i32, i32, i32, i32
  }
  func.func @transform_2(%arg0: i32, %arg1: i32) -> (i32, i32) {
    %c0_i32 = arith.constant 0 : i32
    %c0_i32_0 = arith.constant 0 : i32
    %c0_i32_1 = arith.constant 0 : i32
    return %c0_i32, %c0_i32_0 : i32, i32
  }
  func.func @transform_3(%arg0: i32, %arg1: i32) -> (i32, i32) {
    %c0_i32 = arith.constant 0 : i32
    %c0_i32_0 = arith.constant 0 : i32
    %c0_i32_1 = arith.constant 0 : i32
    return %c0_i32, %c0_i32_0 : i32, i32
  }
  func.func @transform_4(%arg0: i32, %arg1: i32) -> (i32, i32) {
    %c0_i32 = arith.constant 0 : i32
    %c0_i32_0 = arith.constant 0 : i32
    %c0_i32_1 = arith.constant 0 : i32
    return %c0_i32, %c0_i32_0 : i32, i32
  }
  func.func @transform_5(%arg0: i32, %arg1: i32) -> (i32, i32) {
    %c0_i32 = arith.constant 0 : i32
    %c0_i32_0 = arith.constant 0 : i32
    %c0_i32_1 = arith.constant 0 : i32
    return %c0_i32, %c0_i32_0 : i32, i32
  }
  func.func @transform_6(%arg0: i32, %arg1: i32) -> (i32, i32, i32) {
    %c0_i32 = arith.constant 0 : i32
    %c0_i32_0 = arith.constant 0 : i32
    return %arg1, %c0_i32, %arg0 : i32, i32, i32
  }
}

module attributes {stable_mosaic.version = 11 : i64} {
  func.func @kernel(%arg0: i32, %arg1: i32, %arg2: memref<1x4x16xf32, #tpu.memory_space<vmem>>, %arg3: memref<1x1x4x8xf32, #tpu.memory_space<vmem>>, %arg4: memref<4x12xf32, #tpu.memory_space<vmem>>, %arg5: memref<4x1xf32, #tpu.memory_space<vmem>>, %arg6: memref<4x12xf32, #tpu.memory_space<vmem>>, %arg7: memref<4x1xf32, #tpu.memory_space<vmem>>, %arg8: memref<1x4x16xf32, #tpu.memory_space<vmem>>) attributes {dimension_semantics = [#tpu.dimension_semantics<parallel>, #tpu.dimension_semantics<parallel>], iteration_bounds = array<i64: 1, 2>, scalar_prefetch = 0 : i64, scratch_operands = 0 : i64, tpu.core_type = #tpu.core_type<tc>, window_params = [{transform_indices = @transform_0, window_bounds = array<i64: 1, 4, 16>}, {transform_indices = @transform_1, window_bounds = array<i64: 1, 1, 4, 8>}, {pipeline_mode = #tpu.pipeline_mode<synchronous>, transform_indices = @transform_2, window_bounds = array<i64: 4, 12>}, {pipeline_mode = #tpu.pipeline_mode<synchronous>, transform_indices = @transform_3, window_bounds = array<i64: 4, 1>}, {pipeline_mode = #tpu.pipeline_mode<synchronous>, transform_indices = @transform_4, window_bounds = array<i64: 4, 12>}, {pipeline_mode = #tpu.pipeline_mode<synchronous>, transform_indices = @transform_5, window_bounds = array<i64: 4, 1>}, {transform_indices = @transform_6, window_bounds = array<i64: 1, 4, 16>}]} {
    %c16_i32 = arith.constant 16 : i32
    %0 = arith.muli %arg0, %c16_i32 : i32
    %c0 = arith.constant 0 : index
    %c0_0 = arith.constant 0 : index
    %c0_1 = arith.constant 0 : index
    %1 = vector.load %arg2[%c0, %c0_0, %c0_1] : memref<1x4x16xf32, #tpu.memory_space<vmem>>, vector<1x4x16xf32>
    %2 = vector.shape_cast %1 : vector<1x4x16xf32> to vector<4x16xf32>
    %c0_2 = arith.constant 0 : index
    %c0_3 = arith.constant 0 : index
    %c0_4 = arith.constant 0 : index
    %c0_5 = arith.constant 0 : index
    %3 = vector.load %arg3[%c0_2, %c0_3, %c0_4, %c0_5] : memref<1x1x4x8xf32, #tpu.memory_space<vmem>>, vector<1x1x4x8xf32>
    %4 = vector.shape_cast %3 : vector<1x1x4x8xf32> to vector<4x8xf32>
    %5 = vector.extract_strided_slice %4 {offsets = [0, 0], sizes = [4, 4], strides = [1, 1]} : vector<4x8xf32> to vector<4x4xf32>
    %6 = vector.extract_strided_slice %4 {offsets = [0, 4], sizes = [4, 4], strides = [1, 1]} : vector<4x8xf32> to vector<4x4xf32>
    %7 = tpu.concatenate %5, %2, %6 in 1 : vector<4x4xf32>, vector<4x16xf32>, vector<4x4xf32> -> vector<4x24xf32>
    %cst = arith.constant 0.000000e+00 : f32
    %8 = vector.broadcast %cst : f32 to vector<4x24xf32>
    %9 = arith.cmpf ogt, %7, %8 : vector<4x24xf32>
    %cst_6 = arith.constant 1.000000e-01 : f32
    %10 = vector.broadcast %cst_6 : f32 to vector<4x24xf32>
    %11 = arith.mulf %10, %7 : vector<4x24xf32>
    %12 = arith.select %9, %7, %11 : vector<4x24xi1>, vector<4x24xf32>
    %13 = vector.extract_strided_slice %12 {offsets = [0, 0], sizes = [4, 22], strides = [1, 1]} : vector<4x24xf32> to vector<4x22xf32>
    %14 = vector.extract_strided_slice %12 {offsets = [0, 1], sizes = [4, 22], strides = [1, 1]} : vector<4x24xf32> to vector<4x22xf32>
    %15 = vector.extract_strided_slice %12 {offsets = [0, 2], sizes = [4, 22], strides = [1, 1]} : vector<4x24xf32> to vector<4x22xf32>
    %16 = tpu.concatenate %13, %14, %15 in 0 : vector<4x22xf32>, vector<4x22xf32>, vector<4x22xf32> -> vector<12x22xf32>
    %17 = vector.extract_strided_slice %7 {offsets = [0, 1], sizes = [4, 22], strides = [1, 1]} : vector<4x24xf32> to vector<4x22xf32>
    %c0_7 = arith.constant 0 : index
    %c0_8 = arith.constant 0 : index
    %18 = vector.load %arg5[%c0_7, %c0_8] : memref<4x1xf32, #tpu.memory_space<vmem>>, vector<4x1xf32>
    %19 = vector.broadcast %18 : vector<4x1xf32> to vector<4x22xf32>
    %20 = arith.addf %17, %19 : vector<4x22xf32>
    %c0_9 = arith.constant 0 : index
    %c0_10 = arith.constant 0 : index
    %21 = vector.load %arg4[%c0_9, %c0_10] : memref<4x12xf32, #tpu.memory_space<vmem>>, vector<4x12xf32>
    %cst_11 = arith.constant dense<0.000000e+00> : vector<4x22xf32>
    %22 = tpu.matmul %21, %16, %cst_11 {dimension_numbers = #tpu.dot_dimension_numbers<[1], [0], [0], [1], [0, 0, 1, 1], [], []>} : vector<4x12xf32>, vector<12x22xf32>, vector<4x22xf32> -> vector<4x22xf32>
    %23 = arith.addf %20, %22 : vector<4x22xf32>
    %c3_i32 = arith.constant 3 : i32
    %24 = arith.subi %0, %c3_i32 : i32
    %25 = tpu.iota {dimensions = array<i32: 1>} : vector<1x22xi32>
    %26 = vector.broadcast %24 : i32 to vector<1x22xi32>
    %27 = arith.addi %26, %25 : vector<1x22xi32>
    %c0_i32 = arith.constant 0 : i32
    %28 = vector.broadcast %c0_i32 : i32 to vector<1x22xi32>
    %29 = arith.cmpi sge, %27, %28 : vector<1x22xi32>
    %c16_i32_12 = arith.constant 16 : i32
    %30 = vector.broadcast %c16_i32_12 : i32 to vector<1x22xi32>
    %31 = arith.cmpi slt, %27, %30 : vector<1x22xi32>
    %32 = arith.andi %29, %31 : vector<1x22xi1>
    %cst_13 = arith.constant 0.000000e+00 : f32
    %33 = vector.shape_cast %32 : vector<1x22xi1> to vector<1x22xi1>
    %34 = vector.broadcast %33 : vector<1x22xi1> to vector<4x22xi1>
    %35 = vector.broadcast %cst_13 : f32 to vector<4x22xf32>
    %36 = arith.select %34, %23, %35 : vector<4x22xi1>, vector<4x22xf32>
    %cst_14 = arith.constant 0.000000e+00 : f32
    %37 = vector.broadcast %cst_14 : f32 to vector<4x22xf32>
    %38 = arith.cmpf ogt, %36, %37 : vector<4x22xf32>
    %cst_15 = arith.constant 1.000000e-01 : f32
    %39 = vector.broadcast %cst_15 : f32 to vector<4x22xf32>
    %40 = arith.mulf %39, %36 : vector<4x22xf32>
    %41 = arith.select %38, %36, %40 : vector<4x22xi1>, vector<4x22xf32>
    %42 = vector.extract_strided_slice %41 {offsets = [0, 0], sizes = [4, 16], strides = [1, 1]} : vector<4x22xf32> to vector<4x16xf32>
    %43 = vector.extract_strided_slice %41 {offsets = [0, 3], sizes = [4, 16], strides = [1, 1]} : vector<4x22xf32> to vector<4x16xf32>
    %44 = vector.extract_strided_slice %41 {offsets = [0, 6], sizes = [4, 16], strides = [1, 1]} : vector<4x22xf32> to vector<4x16xf32>
    %45 = tpu.concatenate %42, %43, %44 in 0 : vector<4x16xf32>, vector<4x16xf32>, vector<4x16xf32> -> vector<12x16xf32>
    %46 = vector.extract_strided_slice %36 {offsets = [0, 3], sizes = [4, 16], strides = [1, 1]} : vector<4x22xf32> to vector<4x16xf32>
    %c0_16 = arith.constant 0 : index
    %c0_17 = arith.constant 0 : index
    %47 = vector.load %arg7[%c0_16, %c0_17] : memref<4x1xf32, #tpu.memory_space<vmem>>, vector<4x1xf32>
    %48 = vector.broadcast %47 : vector<4x1xf32> to vector<4x16xf32>
    %49 = arith.addf %46, %48 : vector<4x16xf32>
    %c0_18 = arith.constant 0 : index
    %c0_19 = arith.constant 0 : index
    %50 = vector.load %arg6[%c0_18, %c0_19] : memref<4x12xf32, #tpu.memory_space<vmem>>, vector<4x12xf32>
    %cst_20 = arith.constant dense<0.000000e+00> : vector<4x16xf32>
    %51 = tpu.matmul %50, %45, %cst_20 {dimension_numbers = #tpu.dot_dimension_numbers<[1], [0], [0], [1], [0, 0, 1, 1], [], []>} : vector<4x12xf32>, vector<12x16xf32>, vector<4x16xf32> -> vector<4x16xf32>
    %52 = arith.addf %49, %51 : vector<4x16xf32>
    %c0_21 = arith.constant 0 : index
    %c0_22 = arith.constant 0 : index
    %c0_23 = arith.constant 0 : index
    %53 = vector.load %arg8[%c0_21, %c0_22, %c0_23] : memref<1x4x16xf32, #tpu.memory_space<vmem>>, vector<1x4x16xf32>
    %54 = vector.shape_cast %53 : vector<1x4x16xf32> to vector<4x16xf32>
    %55 = vector.shape_cast %52 : vector<4x16xf32> to vector<1x4x16xf32>
    tpu.vector_store %arg8[%c0_21, %c0_22, %c0_23], %55 {strides = array<i32>} : memref<1x4x16xf32, #tpu.memory_space<vmem>>, vector<1x4x16xf32>,
    return
  }
  func.func @transform_0(%arg0: i32, %arg1: i32) -> (i32, i32, i32) {
    %c0_i32 = arith.constant 0 : i32
    %c0_i32_0 = arith.constant 0 : i32
    return %arg1, %c0_i32, %arg0 : i32, i32, i32
  }
  func.func @transform_1(%arg0: i32, %arg1: i32) -> (i32, i32, i32, i32) {
    %c0_i32 = arith.constant 0 : i32
    %c0_i32_0 = arith.constant 0 : i32
    %c0_i32_1 = arith.constant 0 : i32
    return %arg1, %arg0, %c0_i32, %c0_i32_0 : i32, i32, i32, i32
  }
  func.func @transform_2(%arg0: i32, %arg1: i32) -> (i32, i32) {
    %c0_i32 = arith.constant 0 : i32
    %c0_i32_0 = arith.constant 0 : i32
    %c0_i32_1 = arith.constant 0 : i32
    return %c0_i32, %c0_i32_0 : i32, i32
  }
  func.func @transform_3(%arg0: i32, %arg1: i32) -> (i32, i32) {
    %c0_i32 = arith.constant 0 : i32
    %c0_i32_0 = arith.constant 0 : i32
    %c0_i32_1 = arith.constant 0 : i32
    return %c0_i32, %c0_i32_0 : i32, i32
  }
  func.func @transform_4(%arg0: i32, %arg1: i32) -> (i32, i32) {
    %c0_i32 = arith.constant 0 : i32
    %c0_i32_0 = arith.constant 0 : i32
    %c0_i32_1 = arith.constant 0 : i32
    return %c0_i32, %c0_i32_0 : i32, i32
  }
  func.func @transform_5(%arg0: i32, %arg1: i32) -> (i32, i32) {
    %c0_i32 = arith.constant 0 : i32
    %c0_i32_0 = arith.constant 0 : i32
    %c0_i32_1 = arith.constant 0 : i32
    return %c0_i32, %c0_i32_0 : i32, i32
  }
  func.func @transform_6(%arg0: i32, %arg1: i32) -> (i32, i32, i32) {
    %c0_i32 = arith.constant 0 : i32
    %c0_i32_0 = arith.constant 0 : i32
    return %arg1, %c0_i32, %arg0 : i32, i32, i32
  }
}

</mosaic_0001>

<llo_original>
// kernel: tpu_custom_call.1
$region0: #{tpu_custom_call.1}
  #allocation0 [shape = 'u32[]', space=smem, size = 0x4, offset = 0x4, fixed_abs, tag = 'smem constant byte address 0x4 - core index']
  #allocation1 [shape = 'u32[144,128]{1,0:T(1,128)}', space=vmem, size = 0x12000, scoped, tag = 'internal scratch']
  %s0 = inlined_call_operand.vmem [shape: f32[2,4,16], index: 0, kind: input, shape index: {}]
  %s1 = inlined_call_operand.hbm [shape: f32[2,1,4,8], index: 1, kind: input, shape index: {}]
  %s2 = inlined_call_operand.vmem [shape: f32[4,12], index: 2, kind: input, shape index: {}]
  %s3 = inlined_call_operand.vmem [shape: f32[4,1], index: 3, kind: input, shape index: {}]
  %s4 = inlined_call_operand.vmem [shape: f32[4,12], index: 4, kind: input, shape index: {}]
  %s5 = inlined_call_operand.vmem [shape: f32[4,1], index: 5, kind: input, shape index: {}]
  %s6 = inlined_call_operand.hbm [shape: f32[2,4,16], index: 6, kind: output, shape index: {}]
  %s7 = sld [smem:[#allocation0]]
  $region61: #{tpu_custom_call.1} parent=0
    _
  %s9 = ssub.s32 1, %s7
  %s10 = scalar_select 0, %s9, %s7
  $region1: #{tpu_custom_call.1} parent=0
    #allocation2 [shape = 'u8[4096]{0}', space=vmem, size = 0x1000, scoped, tag = 'input window, operand 1']
    #allocation3 [shape = 's32[2]{0}', space=sflag, size = 0x8, scoped, tag = 'scoped memory for tpu_custom_call.1']
    #allocation4 [shape = 's32[2]{0}', space=sflag, size = 0x8, scoped, tag = 'scoped memory for tpu_custom_call.1']
    #allocation5 [shape = 'u8[4096]{0}', space=vmem, size = 0x1000, scoped, tag = 'output window, operand 0']
    %11 = vsyncpa [#allocation3], 0
    %s12 = scalar_lea.sflag [#allocation3], 1
    %13 = vsyncpa %s12, 0
    %14 = vsyncpa [#allocation4], 0
    %s15 = scalar_lea.sflag [#allocation4], 1
    %16 = vsyncpa %s15, 0
    loop: start=0, step=1, limit=4
    $region2: #{tpu_custom_call.1} parent=1 // loop_pre_header
      _
    $region3: #{tpu_custom_call.1} parent=1 // loop_header
      %s18 = sphi 0, %s22
      %p19 = scmp.ge.s32.totalorder %s18, 4
      %s25 = sphi 0, %s37
      %s26 = sphi 0, %s33
      %s27 = sphi 0, %s25
      %s28 = sphi 0, %s26
      %s29 = sphi 0, %s27
      %s30 = sphi 0, %s28
      %s42 = sphi 0, %s44
      %s45 = sphi 0, %s42
      %s46 = sphi 0, %s45
      %s62 = sphi 0, %s46
      %s70 = sphi 0, %s72
      %s73 = sphi 0, %s70
      %s74 = sphi 0, %s73
      %s90 = sphi 0, %s74
      %s94 = sphi 0, %s94
      %s96 = sphi 0, %s94
      %s97 = sphi 0, %s96
      %s111 = sphi 0, %s97
      %s115 = sphi 0, %s115
      %s117 = sphi 0, %s115
      %s118 = sphi 0, %s117
      %s132 = sphi 0, %s118
      %s136 = sphi 0, %s136
      %s138 = sphi 0, %s136
      %s139 = sphi 0, %s138
      %s153 = sphi 0, %s139
      %s157 = sphi 0, %s157
      %s159 = sphi 0, %s157
      %s160 = sphi 0, %s159
      %s174 = sphi 0, %s160
      %s182 = sphi 0, %s184
      %s185 = sphi 0, %s182
      %s186 = sphi 0, %s185
      %s202 = sphi 0, %s186
    $region4: #{tpu_custom_call.1} parent=1 // loop_header_branch
      %21 = sbr.rel (%p19) target = $region8
    $region5: #{tpu_custom_call.1} parent=1 // loop_body
      %s23 = ssub.s32 %s18, 1
      %s24 = ssub.s32 %s18, 2
      %s31 = sadd.s32 1, %s26
      %p32 = scmp.ge.s32.totalorder %s31, 2
      %s33 = scalar_select %p32, 0, %s31
      %s34 = sadd.s32 1, %s25
      %s35 = scalar_select %p32, %s34, %s25
      %p36 = scmp.ge.s32.totalorder %s35, 1
      %s37 = scalar_select %p36, 0, %s35
      %s38 = ssub.s32 %s26, %s33
      %s39 = ssub.s32 %s25, %s37
      %s40 = sor.u32 %s38, %s39
      %p41 = scmp.eq.s32.totalorder %s40, 0
      %s43 = sadd.s32 %s42, 1
      %s44 = scalar_select %p41, %s42, %s43
      %p47 = pneg %p41
      %p48 = scmp.eq.s32.totalorder %s18, 1
      %p49 = por %p47, %p48
      %p50 = scmp.ne.s32.totalorder %s42, %s45
      %p51 = scmp.eq.s32.totalorder %s18, 0
      %p52 = por %p50, %p51
      %p53 = scmp.ne.s32.totalorder %s42, %s45
      %p54 = scmp.eq.s32.totalorder %s23, 1
      %p55 = por %p53, %p54
      %p56 = scmp.ne.s32.totalorder %s45, %s46
      %p57 = scmp.eq.s32.totalorder %s23, 0
      %p58 = por %p56, %p57
      %p59 = scmp.ne.s32.totalorder %s45, %s46
      %p60 = scmp.eq.s32.totalorder %s24, 1
      %p61 = por %p59, %p60
      %p63 = scmp.ne.s32.totalorder %s46, %s62
      %p64 = scmp.eq.s32.totalorder %s24, 0
      %p65 = por %p63, %p64
      %s66 = ssub.s32 %s26, %s33
      %s67 = ssub.s32 %s25, %s37
      %s68 = sor.u32 %s66, %s67
      %p69 = scmp.eq.s32.totalorder %s68, 0
      %s71 = sadd.s32 %s70, 1
      %s72 = scalar_select %p69, %s70, %s71
      %p75 = pneg %p69
      %p76 = scmp.eq.s32.totalorder %s18, 1
      %p77 = por %p75, %p76
      %p78 = scmp.ne.s32.totalorder %s70, %s73
      %p79 = scmp.eq.s32.totalorder %s18, 0
      %p80 = por %p78, %p79
      %p81 = scmp.ne.s32.totalorder %s70, %s73
      %p82 = scmp.eq.s32.totalorder %s23, 1
      %p83 = por %p81, %p82
      %p84 = scmp.ne.s32.totalorder %s73, %s74
      %p85 = scmp.eq.s32.totalorder %s23, 0
      %p86 = por %p84, %p85
      %p87 = scmp.ne.s32.totalorder %s73, %s74
      %p88 = scmp.eq.s32.totalorder %s24, 1
      %p89 = por %p87, %p88
      %p91 = scmp.ne.s32.totalorder %s74, %s90
      %p92 = scmp.eq.s32.totalorder %s24, 0
      %p93 = por %p91, %p92
      %s95 = sadd.s32 %s94, 1
      %p98 = scmp.eq.s32.totalorder %s18, 1
      %p99 = scmp.ne.s32.totalorder %s94, %s96
      %p100 = scmp.eq.s32.totalorder %s18, 0
      %p101 = por %p99, %p100
      %p102 = scmp.ne.s32.totalorder %s94, %s96
      %p103 = scmp.eq.s32.totalorder %s23, 1
      %p104 = por %p102, %p103
      %p105 = scmp.ne.s32.totalorder %s96, %s97
      %p106 = scmp.eq.s32.totalorder %s23, 0
      %p107 = por %p105, %p106
      %p108 = scmp.ne.s32.totalorder %s96, %s97
      %p109 = scmp.eq.s32.totalorder %s24, 1
      %p110 = por %p108, %p109
      %p112 = scmp.ne.s32.totalorder %s97, %s111
      %p113 = scmp.eq.s32.totalorder %s24, 0
      %p114 = por %p112, %p113
      %s116 = sadd.s32 %s115, 1
      %p119 = scmp.eq.s32.totalorder %s18, 1
      %p120 = scmp.ne.s32.totalorder %s115, %s117
      %p121 = scmp.eq.s32.totalorder %s18, 0
      %p122 = por %p120, %p121
      %p123 = scmp.ne.s32.totalorder %s115, %s117
      %p124 = scmp.eq.s32.totalorder %s23, 1
      %p125 = por %p123, %p124
      %p126 = scmp.ne.s32.totalorder %s117, %s118
      %p127 = scmp.eq.s32.totalorder %s23, 0
      %p128 = por %p126, %p127
      %p129 = scmp.ne.s32.totalorder %s117, %s118
      %p130 = scmp.eq.s32.totalorder %s24, 1
      %p131 = por %p129, %p130
      %p133 = scmp.ne.s32.totalorder %s118, %s132
      %p134 = scmp.eq.s32.totalorder %s24, 0
      %p135 = por %p133, %p134
      %s137 = sadd.s32 %s136, 1
      %p140 = scmp.eq.s32.totalorder %s18, 1
      %p141 = scmp.ne.s32.totalorder %s136, %s138
      %p142 = scmp.eq.s32.totalorder %s18, 0
      %p143 = por %p141, %p142
      %p144 = scmp.ne.s32.totalorder %s136, %s138
      %p145 = scmp.eq.s32.totalorder %s23, 1
      %p146 = por %p144, %p145
      %p147 = scmp.ne.s32.totalorder %s138, %s139
      %p148 = scmp.eq.s32.totalorder %s23, 0
      %p149 = por %p147, %p148
      %p150 = scmp.ne.s32.totalorder %s138, %s139
      %p151 = scmp.eq.s32.totalorder %s24, 1
      %p152 = por %p150, %p151
      %p154 = scmp.ne.s32.totalorder %s139, %s153
      %p155 = scmp.eq.s32.totalorder %s24, 0
      %p156 = por %p154, %p155
      %s158 = sadd.s32 %s157, 1
      %p161 = scmp.eq.s32.totalorder %s18, 1
      %p162 = scmp.ne.s32.totalorder %s157, %s159
      %p163 = scmp.eq.s32.totalorder %s18, 0
      %p164 = por %p162, %p163
      %p165 = scmp.ne.s32.totalorder %s157, %s159
      %p166 = scmp.eq.s32.totalorder %s23, 1
      %p167 = por %p165, %p166
      %p168 = scmp.ne.s32.totalorder %s159, %s160
      %p169 = scmp.eq.s32.totalorder %s23, 0
      %p170 = por %p168, %p169
      %p171 = scmp.ne.s32.totalorder %s159, %s160
      %p172 = scmp.eq.s32.totalorder %s24, 1
      %p173 = por %p171, %p172
      %p175 = scmp.ne.s32.totalorder %s160, %s174
      %p176 = scmp.eq.s32.totalorder %s24, 0
      %p177 = por %p175, %p176
      %s178 = ssub.s32 %s26, %s33
      %s179 = ssub.s32 %s25, %s37
      %s180 = sor.u32 %s178, %s179
      %p181 = scmp.eq.s32.totalorder %s180, 0
      %s183 = sadd.s32 %s182, 1
      %s184 = scalar_select %p181, %s182, %s183
      %p187 = pneg %p181
      %p188 = scmp.eq.s32.totalorder %s18, 1
      %p189 = por %p187, %p188
      %p190 = scmp.ne.s32.totalorder %s182, %s185
      %p191 = scmp.eq.s32.totalorder %s18, 0
      %p192 = por %p190, %p191
      %p193 = scmp.ne.s32.totalorder %s182, %s185
      %p194 = scmp.eq.s32.totalorder %s23, 1
      %p195 = por %p193, %p194
      %p196 = scmp.ne.s32.totalorder %s185, %s186
      %p197 = scmp.eq.s32.totalorder %s23, 0
      %p198 = por %p196, %p197
      %p199 = scmp.ne.s32.totalorder %s185, %s186
      %p200 = scmp.eq.s32.totalorder %s24, 1
      %p201 = por %p199, %p200
      %p203 = scmp.ne.s32.totalorder %s186, %s202
      %p204 = scmp.eq.s32.totalorder %s24, 0
      %p205 = por %p203, %p204
      %p206 = scmp.le.s32.totalorder 1, %s18
      %p207 = scmp.lt.s32.totalorder %s18, 3
      %p208 = pnand %p206, %p207
      %p209 = pneg %p208
      // Predicated region
      $region9: #{tpu_custom_call.1} parent=5 // pred_check
        _
      $region10: #{tpu_custom_call.1} parent=5 // pred_check_branch
        %211 = sbr.rel (%p208) target = $region12
      $region11: #{tpu_custom_call.1} parent=5 // pred_region
        %s212 = ssub.s32 %s18, 1
        // Predicated region
        $region13: #{tpu_custom_call.1} parent=11 // pred_check
          %p213 = pneg %p107
        $region14: #{tpu_custom_call.1} parent=11 // pred_check_branch
          %215 = sbr.rel (%p213) target = $region16
        $region15: #{tpu_custom_call.1} parent=11 // pred_region
          _
        $region16: #{tpu_custom_call.1} parent=11 // pred_fallthru
          _
        // Predicated region
        $region17: #{tpu_custom_call.1} parent=11 // pred_check
          %p216 = pneg %p128
        $region18: #{tpu_custom_call.1} parent=11 // pred_check_branch
          %218 = sbr.rel (%p216) target = $region20
        $region19: #{tpu_custom_call.1} parent=11 // pred_region
          _
        $region20: #{tpu_custom_call.1} parent=11 // pred_fallthru
          _
        // Predicated region
        $region21: #{tpu_custom_call.1} parent=11 // pred_check
          %p219 = pneg %p149
        $region22: #{tpu_custom_call.1} parent=11 // pred_check_branch
          %221 = sbr.rel (%p219) target = $region24
        $region23: #{tpu_custom_call.1} parent=11 // pred_region
          _
        $region24: #{tpu_custom_call.1} parent=11 // pred_fallthru
          _
        // Predicated region
        $region25: #{tpu_custom_call.1} parent=11 // pred_check
          %p222 = pneg %p170
        $region26: #{tpu_custom_call.1} parent=11 // pred_check_branch
          %224 = sbr.rel (%p222) target = $region28
        $region27: #{tpu_custom_call.1} parent=11 // pred_region
          _
        $region28: #{tpu_custom_call.1} parent=11 // pred_fallthru
          _
      $region12: #{tpu_custom_call.1} parent=5 // pred_fallthru
        _
      %p225 = scmp.lt.s32.totalorder %s18, 2
      // Predicated region
      $region29: #{tpu_custom_call.1} parent=5 // pred_check
        %p226 = pneg %p225
      $region30: #{tpu_custom_call.1} parent=5 // pred_check_branch
        %228 = sbr.rel (%p226) target = $region32
      $region31: #{tpu_custom_call.1} parent=5 // pred_region
        // Predicated region
        $region33: #{tpu_custom_call.1} parent=31 // pred_check
          %p229 = pneg %p52
        $region34: #{tpu_custom_call.1} parent=31 // pred_check_branch
          %231 = sbr.rel (%p229) target = $region36
        $region35: #{tpu_custom_call.1} parent=31 // pred_region
          %p232 = scmp.lt.s32.totalorder %s26, 1
          %s233 = scalar_select %p232, %s26, 1
          %p234 = scmp.lt.s32.totalorder %s25, 0
          %s235 = scalar_select %p234, %s25, 0
          %s236 = sadd.s32 %s235, %s233
          %s237 = smul.addr %s236, 4
          %s238 = scalar_lea.vmem %s0, %s237
        $region36: #{tpu_custom_call.1} parent=31 // pred_fallthru
          _
        // Predicated region
        $region37: #{tpu_custom_call.1} parent=31 // pred_check
          %p239 = pneg %p80
        $region38: #{tpu_custom_call.1} parent=31 // pred_check_branch
          %241 = sbr.rel (%p239) target = $region40
        $region39: #{tpu_custom_call.1} parent=31 // pred_region
          %s242 = sand.u32 %s70, 1
          %s243 = scalar_lea.sflag [#allocation3], %s242
          %s244 = sand.u32 %s70, 1
          %s245 = smul.addr %s244, 4
          %s246 = scalar_lea.vmem [#allocation2], %s245
          %s248 = ssub.s32 64, 64
          %249 = vsyncadd %s243, %s248
          %s250 = sadd.s32 %s25, %s26
          %s251 = smul.addr %s250, 64
          %s252 = scalar_lea.hbm %s1, %s251
          %s254 = sshll.u32 %s246, 4
          %s255 = int_to_ptr.vmem [resolvable:$true] %s254
          %257 = dma.hbm_to_vmem [thread:$0]  %s252, 64, %s255, %s243
        $region40: #{tpu_custom_call.1} parent=31 // pred_fallthru
          _
      $region32: #{tpu_custom_call.1} parent=5 // pred_fallthru
        _
      %p258 = scmp.le.s32.totalorder 1, %s18
      %p259 = scmp.lt.s32.totalorder %s18, 3
      %p260 = pnand %p258, %p259
      %p261 = pneg %p260
      // Predicated region
      $region41: #{tpu_custom_call.1} parent=5 // pred_check
        _
      $region42: #{tpu_custom_call.1} parent=5 // pred_check_branch
        %263 = sbr.rel (%p260) target = $region44
      $region43: #{tpu_custom_call.1} parent=5 // pred_region
        %s264 = ssub.s32 %s18, 1
        %s265 = sand.u32 %s73, 1
        %s266 = scalar_lea.sflag [#allocation3], %s265
        %s267 = sand.u32 %s73, 1
        %s268 = smul.addr %s267, 4
        %s269 = scalar_lea.vmem [#allocation2], %s268
        // Predicated region
        $region45: #{tpu_custom_call.1} parent=43 // pred_check
          %p270 = pneg %p86
        $region46: #{tpu_custom_call.1} parent=43 // pred_check_branch
          %272 = sbr.rel (%p270) target = $region48
        $region47: #{tpu_custom_call.1} parent=43 // pred_region
          %273 = dma.done %s266, 64
        $region48: #{tpu_custom_call.1} parent=43 // pred_fallthru
          _
        %p274 = scmp.lt.s32.totalorder %s28, 1
        %s275 = scalar_select %p274, %s28, 1
        %p276 = scmp.lt.s32.totalorder %s27, 0
        %s277 = scalar_select %p276, %s27, 0
        %s278 = sadd.s32 %s277, %s275
        %s279 = smul.addr %s278, 4
        %s280 = scalar_lea.vmem %s0, %s279
        %p281 = pneg %p58
        %p282 = pneg %p55
        %s283 = sand.u32 %s73, 1
        %s284 = scalar_lea.sflag [#allocation3], %s283
        %s285 = sand.u32 %s73, 1
        %s286 = smul.addr %s285, 4
        %s287 = scalar_lea.vmem [#allocation2], %s286
        %p288 = pneg %p86
        %p289 = pneg %p83
        %p290 = pneg %p107
        %p291 = pneg %p104
        %p292 = pneg %p128
        %p293 = pneg %p125
        %p294 = pneg %p149
        %p295 = pneg %p146
        %p296 = pneg %p170
        %p297 = pneg %p167
        %p298 = pneg %p198
        %p299 = pneg %p195
        %s300 = sand.u32 %s185, 1
        %s301 = scalar_lea.sflag [#allocation4], %s300
        %s302 = sand.u32 %s185, 1
        %s303 = smul.addr %s302, 4
        %s304 = scalar_lea.vmem [#allocation5], %s303
        %p305 = scmp.lt.s32.totalorder %s28, 1
        %s306 = scalar_select %p305, %s28, 1
        %p307 = scmp.lt.s32.totalorder %s27, 0
        %s308 = scalar_select %p307, %s27, 0
        %s309 = sadd.s32 %s308, %s306
        %s310 = smul.addr %s309, 4
        %s311 = scalar_lea.vmem %s0, %s310
        %s312 = smul.u32 %s27, 16
        %v313 = vld [vmem:[%s311] sm:$0xf]
        %v314 = vld [vmem:[%s269] sm:$0xf]
        %316 = vrot.lane.b32.xlu0 %v313, 4
        %v317 = vpop.permute.xlu0 %316
        %320 = vrot.lane.b32.xlu0 %v314, 16
        %v321 = vpop.permute.xlu0 %320
        %vm323 = vcmask 31744
        %v324 = vsel %vm323, %v314, %v317
        %vm325 = vcmask 162816
        %v326 = vsel %vm325, %v324, %v321
        %vm327 = vcmp.gt.f32.partialorder %v326, 0.0
        %v328 = vmul.f32 %v326, 0.1
        %v329 = vsel %vm327, %v326, %v328
        %v331 = vrot.slane %v329, 4
        %332 = vrot.lane.b32.xlu0 %v331, 127
        %v333 = vpop.permute.xlu0 %332
        %335 = vrot.lane.b32.xlu0 %v329, 126
        %v336 = vpop.permute.xlu0 %335
        %vm337 = vcmask 1043456
        %v338 = vsel %vm337, %v329, %v333
        %v339 = vld [vmem:[%s3] sm:$0xf]
        %341 = vset.pattern.permute.xlu0 0
        %342 = vperm.xlu0 %341, %v339
        %v343 = vpop.permute.xlu0 %342
        %v345 = vadd.f32 %v326, %v343
        %v346 = vld [vmem:[%s2] sm:$0xf]
        %vm347 = vcmask 97280
        %v349 = vsel %vm347, %v346, 0
        %v351 = vsel %vm337, %v336, 0
        %353 = vmatprep.subr.mxu0 0.0
        %354 = vmatpush1.msra.mxu0 %v338
        %355 = vmatprep.subr.mxu0 0.0
        %356 = vmatpush1.msra.mxu0 %v351
        %357 = vmatprep.subr.mxu0 0.0
        %358 = vmatpush1.msra.mxu0 0.0
        %359 = vmatprep.subr.mxu0 0.0
        %360 = vmatpush1.msra.mxu0 0.0
        %361 = vmatprep.subr.mxu0 0.0
        %362 = vmatpush1.msra.mxu0 0.0
        %363 = vmatprep.subr.mxu0 0.0
        %364 = vmatpush1.msra.mxu0 0.0
        %365 = vmatprep.subr.mxu0 0.0
        %366 = vmatpush1.msra.mxu0 0.0
        %367 = vmatprep.subr.mxu0 0.0
        %368 = vmatpush1.msra.mxu0 0.0
        %369 = vmatprep.subr.mxu0 0.0
        %370 = vmatpush1.msra.mxu0 0.0
        %371 = vmatprep.subr.mxu0 0.0
        %372 = vmatpush1.msra.mxu0 0.0
        %373 = vmatprep.subr.mxu0 0.0
        %374 = vmatpush1.msra.mxu0 0.0
        %375 = vmatprep.subr.mxu0 0.0
        %376 = vmatpush1.msra.mxu0 0.0
        %377 = vmatprep.subr.mxu0 0.0
        %378 = vmatpush1.msra.mxu0 0.0
        %379 = vmatprep.subr.mxu0 0.0
        %380 = vmatpush1.msra.mxu0 0.0
        %381 = vmatprep.subr.mxu0 0.0
        %382 = vmatpush1.msra.mxu0 0.0
        %383 = vmatprep.subr.mxu0 0.0
        %384 = vmatpush1.msra.mxu0 0.0
        %385 = vmatprep.subr.mxu0 0.0
        %386 = vmatpush1.msra.mxu0 0.0
        %387 = vmatprep.subr.mxu0 0.0
        %388 = vmatpush1.msra.mxu0 0.0
        %389 = vmatprep.subr.mxu0 0.0
        %390 = vmatpush1.msra.mxu0 0.0
        %391 = vmatprep.subr.mxu0 0.0
        %392 = vmatpush1.msra.mxu0 0.0
        %393 = vmatprep.subr.mxu0 0.0
        %394 = vmatpush1.msra.mxu0 0.0
        %395 = vmatprep.subr.mxu0 0.0
        %396 = vmatpush1.msra.mxu0 0.0
        %397 = vmatprep.subr.mxu0 0.0
        %398 = vmatpush1.msra.mxu0 0.0
        %399 = vmatprep.subr.mxu0 0.0
        %400 = vmatpush1.msra.mxu0 0.0
        %401 = vmatprep.subr.mxu0 0.0
        %402 = vmatpush1.msra.mxu0 0.0
        %403 = vmatprep.subr.mxu0 0.0
        %404 = vmatpush1.msra.mxu0 0.0
        %405 = vmatprep.subr.mxu0 0.0
        %406 = vmatpush1.msra.mxu0 0.0
        %407 = vmatprep.subr.mxu0 0.0
        %408 = vmatpush1.msra.mxu0 0.0
        %409 = vmatprep.subr.mxu0 0.0
        %410 = vmatpush1.msra.mxu0 0.0
        %411 = vmatprep.subr.mxu0 0.0
        %412 = vmatpush1.msra.mxu0 0.0
        %413 = vmatprep.subr.mxu0 0.0
        %414 = vmatpush1.msra.mxu0 0.0
        %415 = vmatprep.subr.mxu0 0.0
        %416 = vmatpush1.msra.mxu0 0.0
        %417 = vmatprep.mubr.f32.mxu0 0.0
        %418 = vmatmul.mubr.f32.gmra.mrb[0].mxu0 %v349
        %v419 = vpop.f32.mrb[0].mxu0
        %v420 = vadd.f32 0.0, %v419
        %v421 = vpop.f32.mrb[0].mxu0
        %422 = vdwg.mxu0
        %424 = vrot.lane.b32.xlu0 %v420, 1
        %v425 = vpop.permute.xlu0 %424
        %v427 = vadd.f32 %v345, %v425
        %s428 = ssub.s32 %s312, 3
        %v429 = vlaneseq
        %v430 = vand.u32 %v429, 127
        %v431 = vstv %s428
        %v432 = vadd.s32 %v431, %v430
        %vm433 = vcmp.ge.s32.totalorder %v432, 0
        %vm434 = vcmp.lt.s32.totalorder %v432, 16
        %vm435 = vmand %vm433, %vm434
        %v436 = vsel %vm435, 1, 0
        %vm437 = vcmp.eq.s32.totalorder %v436, 1
        %439 = vrot.lane.b32.xlu0 %v427, 127
        %v440 = vpop.permute.xlu0 %439
        %v442 = vsel %vm437, %v440, 0.0
        %vm443 = vcmp.gt.f32.partialorder %v442, 0.0
        %v444 = vmul.f32 %v442, 0.1
        %v445 = vsel %vm443, %v442, %v444
        %v447 = vrot.slane %v445, 4
        %448 = vrot.lane.b32.xlu0 %v447, 125
        %v449 = vpop.permute.xlu0 %448
        %451 = vrot.lane.b32.xlu0 %v445, 122
        %v452 = vpop.permute.xlu0 %451
        %v453 = vsel %vm337, %v445, %v449
        %v454 = vld [vmem:[%s5] sm:$0xf]
        %456 = vset.pattern.permute.xlu0 0
        %457 = vperm.xlu0 %456, %v454
        %v458 = vpop.permute.xlu0 %457
        %v460 = vadd.f32 %v442, %v458
        %v461 = vld [vmem:[%s4] sm:$0xf]
        %v463 = vsel %vm347, %v461, 0
        %v465 = vsel %vm337, %v452, 0
        %467 = vmatprep.subr.mxu0 0.0
        %468 = vmatpush1.msra.mxu0 %v453
        %469 = vmatprep.subr.mxu0 0.0
        %470 = vmatpush1.msra.mxu0 %v465
        %471 = vmatprep.subr.mxu0 0.0
        %472 = vmatpush1.msra.mxu0 0.0
        %473 = vmatprep.subr.mxu0 0.0
        %474 = vmatpush1.msra.mxu0 0.0
        %475 = vmatprep.subr.mxu0 0.0
        %476 = vmatpush1.msra.mxu0 0.0
        %477 = vmatprep.subr.mxu0 0.0
        %478 = vmatpush1.msra.mxu0 0.0
        %479 = vmatprep.subr.mxu0 0.0
        %480 = vmatpush1.msra.mxu0 0.0
        %481 = vmatprep.subr.mxu0 0.0
        %482 = vmatpush1.msra.mxu0 0.0
        %483 = vmatprep.subr.mxu0 0.0
        %484 = vmatpush1.msra.mxu0 0.0
        %485 = vmatprep.subr.mxu0 0.0
        %486 = vmatpush1.msra.mxu0 0.0
        %487 = vmatprep.subr.mxu0 0.0
        %488 = vmatpush1.msra.mxu0 0.0
        %489 = vmatprep.subr.mxu0 0.0
        %490 = vmatpush1.msra.mxu0 0.0
        %491 = vmatprep.subr.mxu0 0.0
        %492 = vmatpush1.msra.mxu0 0.0
        %493 = vmatprep.subr.mxu0 0.0
        %494 = vmatpush1.msra.mxu0 0.0
        %495 = vmatprep.subr.mxu0 0.0
        %496 = vmatpush1.msra.mxu0 0.0
        %497 = vmatprep.subr.mxu0 0.0
        %498 = vmatpush1.msra.mxu0 0.0
        %499 = vmatprep.subr.mxu0 0.0
        %500 = vmatpush1.msra.mxu0 0.0
        %501 = vmatprep.subr.mxu0 0.0
        %502 = vmatpush1.msra.mxu0 0.0
        %503 = vmatprep.subr.mxu0 0.0
        %504 = vmatpush1.msra.mxu0 0.0
        %505 = vmatprep.subr.mxu0 0.0
        %506 = vmatpush1.msra.mxu0 0.0
        %507 = vmatprep.subr.mxu0 0.0
        %508 = vmatpush1.msra.mxu0 0.0
        %509 = vmatprep.subr.mxu0 0.0
        %510 = vmatpush1.msra.mxu0 0.0
        %511 = vmatprep.subr.mxu0 0.0
        %512 = vmatpush1.msra.mxu0 0.0
        %513 = vmatprep.subr.mxu0 0.0
        %514 = vmatpush1.msra.mxu0 0.0
        %515 = vmatprep.subr.mxu0 0.0
        %516 = vmatpush1.msra.mxu0 0.0
        %517 = vmatprep.subr.mxu0 0.0
        %518 = vmatpush1.msra.mxu0 0.0
        %519 = vmatprep.subr.mxu0 0.0
        %520 = vmatpush1.msra.mxu0 0.0
        %521 = vmatprep.subr.mxu0 0.0
        %522 = vmatpush1.msra.mxu0 0.0
        %523 = vmatprep.subr.mxu0 0.0
        %524 = vmatpush1.msra.mxu0 0.0
        %525 = vmatprep.subr.mxu0 0.0
        %526 = vmatpush1.msra.mxu0 0.0
        %527 = vmatprep.subr.mxu0 0.0
        %528 = vmatpush1.msra.mxu0 0.0
        %529 = vmatprep.subr.mxu0 0.0
        %530 = vmatpush1.msra.mxu0 0.0
        %531 = vmatprep.mubr.f32.mxu0 0.0
        %532 = vmatmul.mubr.f32.gmra.mrb[0].mxu0 %v463
        %v533 = vpop.f32.mrb[0].mxu0
        %v534 = vadd.f32 0.0, %v533
        %v535 = vpop.f32.mrb[0].mxu0
        %536 = vdwg.mxu0
        %538 = vrot.lane.b32.xlu0 %v534, 3
        %v539 = vpop.permute.xlu0 %538
        %v541 = vadd.f32 %v460, %v539
        %543 = vrot.lane.b32.xlu0 %v541, 125
        %v544 = vpop.permute.xlu0 %543
        %vm546 = vcmask 125952
        %547 = vst.msk [vmem:[%s304] sm:$0xf] %vm546, %v544
        %s548 = sand.u32 %s185, 1
        %s549 = scalar_lea.sflag [#allocation4], %s548
        %s550 = sand.u32 %s185, 1
        %s551 = smul.addr %s550, 4
        %s552 = scalar_lea.vmem [#allocation5], %s551
        // Predicated region
        $region49: #{tpu_custom_call.1} parent=43 // pred_check
          %p553 = pneg %p195
        $region50: #{tpu_custom_call.1} parent=43 // pred_check_branch
          %555 = sbr.rel (%p553) target = $region52
        $region51: #{tpu_custom_call.1} parent=43 // pred_region
          %s557 = ssub.s32 64, 64
          %558 = vsyncadd %s549, %s557
          %s559 = sadd.s32 %s27, %s28
          %s560 = smul.addr %s559, 64
          %s561 = scalar_lea.hbm %s6, %s560
          %s563 = sshll.u32 %s552, 4
          %s564 = int_to_ptr.vmem [resolvable:$true] %s563
          %566 = dma.vmem_to_hbm [thread:$0]  %s564, 64, %s561, %s549
        $region52: #{tpu_custom_call.1} parent=43 // pred_fallthru
          _
      $region44: #{tpu_custom_call.1} parent=5 // pred_fallthru
        _
      %p567 = scmp.le.s32.totalorder 2, %s18
      // Predicated region
      $region53: #{tpu_custom_call.1} parent=5 // pred_check
        %p568 = pneg %p567
      $region54: #{tpu_custom_call.1} parent=5 // pred_check_branch
        %570 = sbr.rel (%p568) target = $region56
      $region55: #{tpu_custom_call.1} parent=5 // pred_region
        %s571 = ssub.s32 %s18, 2
        // Predicated region
        $region57: #{tpu_custom_call.1} parent=55 // pred_check
          %p572 = pneg %p201
        $region58: #{tpu_custom_call.1} parent=55 // pred_check_branch
          %574 = sbr.rel (%p572) target = $region60
        $region59: #{tpu_custom_call.1} parent=55 // pred_region
          %s575 = sand.u32 %s186, 1
          %s576 = scalar_lea.sflag [#allocation4], %s575
          %s577 = sand.u32 %s186, 1
          %s578 = smul.addr %s577, 4
          %s579 = scalar_lea.vmem [#allocation5], %s578
          %580 = dma.done %s576, 64
        $region60: #{tpu_custom_call.1} parent=55 // pred_fallthru
          _
      $region56: #{tpu_custom_call.1} parent=5 // pred_fallthru
        _
    $region6: #{tpu_custom_call.1} parent=1 // loop_footer
      %s22 = sadd.s32 1, %s18
    $region7: #{tpu_custom_call.1} parent=1 // loop_footer_branch
      %17 = sbr.rel target = $region3
    $region8: #{tpu_custom_call.1} parent=1 // loop_exit
      _
    %581 = vsyncpa [#allocation3], 1
    %s582 = scalar_lea.sflag [#allocation3], 1
    %583 = vsyncpa %s582, 1
    %584 = vsyncpa [#allocation4], 1
    %s585 = scalar_lea.sflag [#allocation4], 1
    %586 = vsyncpa %s585, 1

// kernel: tpu_custom_call.1
$region0: #{tpu_custom_call.1}
  #allocation0 [shape = 'u32[]', space=smem, size = 0x4, offset = 0x4, fixed_abs, tag = 'smem constant byte address 0x4 - core index']
  #allocation1 [shape = 'u32[144,128]{1,0:T(1,128)}', space=vmem, size = 0x12000, scoped, tag = 'internal scratch']
  %s0 = inlined_call_operand.vmem [shape: f32[2,4,16], index: 0, kind: input, shape index: {}]
  %s1 = inlined_call_operand.hbm [shape: f32[2,1,4,8], index: 1, kind: input, shape index: {}]
  %s2 = inlined_call_operand.vmem [shape: f32[4,12], index: 2, kind: input, shape index: {}]
  %s3 = inlined_call_operand.vmem [shape: f32[4,1], index: 3, kind: input, shape index: {}]
  %s4 = inlined_call_operand.vmem [shape: f32[4,12], index: 4, kind: input, shape index: {}]
  %s5 = inlined_call_operand.vmem [shape: f32[4,1], index: 5, kind: input, shape index: {}]
  %s6 = inlined_call_operand.hbm [shape: f32[2,4,16], index: 6, kind: output, shape index: {}]
  %s7 = sld [smem:[#allocation0]]
  $region61: #{tpu_custom_call.1} parent=0
    _
  %s9 = ssub.s32 1, %s7
  %s10 = scalar_select 0, %s9, %s7
  $region1: #{tpu_custom_call.1} parent=0
    #allocation2 [shape = 'u8[4096]{0}', space=vmem, size = 0x1000, scoped, tag = 'input window, operand 1']
    #allocation3 [shape = 's32[2]{0}', space=sflag, size = 0x8, scoped, tag = 'scoped memory for tpu_custom_call.1']
    #allocation4 [shape = 's32[2]{0}', space=sflag, size = 0x8, scoped, tag = 'scoped memory for tpu_custom_call.1']
    #allocation5 [shape = 'u8[4096]{0}', space=vmem, size = 0x1000, scoped, tag = 'output window, operand 0']
    %11 = vsyncpa [#allocation3], 0
    %s12 = scalar_lea.sflag [#allocation3], 1
    %13 = vsyncpa %s12, 0
    %14 = vsyncpa [#allocation4], 0
    %s15 = scalar_lea.sflag [#allocation4], 1
    %16 = vsyncpa %s15, 0
    loop: start=0, step=1, limit=4
    $region2: #{tpu_custom_call.1} parent=1 // loop_pre_header
      _
    $region3: #{tpu_custom_call.1} parent=1 // loop_header
      %s18 = sphi 0, %s22
      %p19 = scmp.ge.s32.totalorder %s18, 4
      %s25 = sphi 0, %s37
      %s26 = sphi 0, %s33
      %s27 = sphi 0, %s25
      %s28 = sphi 0, %s26
      %s29 = sphi 0, %s27
      %s30 = sphi 0, %s28
      %s42 = sphi 0, %s44
      %s45 = sphi 0, %s42
      %s46 = sphi 0, %s45
      %s62 = sphi 0, %s46
      %s70 = sphi 0, %s72
      %s73 = sphi 0, %s70
      %s74 = sphi 0, %s73
      %s90 = sphi 0, %s74
      %s94 = sphi 0, %s94
      %s96 = sphi 0, %s94
      %s97 = sphi 0, %s96
      %s111 = sphi 0, %s97
      %s115 = sphi 0, %s115
      %s117 = sphi 0, %s115
      %s118 = sphi 0, %s117
      %s132 = sphi 0, %s118
      %s136 = sphi 0, %s136
      %s138 = sphi 0, %s136
      %s139 = sphi 0, %s138
      %s153 = sphi 0, %s139
      %s157 = sphi 0, %s157
      %s159 = sphi 0, %s157
      %s160 = sphi 0, %s159
      %s174 = sphi 0, %s160
      %s182 = sphi 0, %s184
      %s185 = sphi 0, %s182
      %s186 = sphi 0, %s185
      %s202 = sphi 0, %s186
    $region4: #{tpu_custom_call.1} parent=1 // loop_header_branch
      %21 = sbr.rel (%p19) target = $region8
    $region5: #{tpu_custom_call.1} parent=1 // loop_body
      %s23 = ssub.s32 %s18, 1
      %s24 = ssub.s32 %s18, 2
      %s31 = sadd.s32 1, %s26
      %p32 = scmp.ge.s32.totalorder %s31, 2
      %s33 = scalar_select %p32, 0, %s31
      %s34 = sadd.s32 1, %s25
      %s35 = scalar_select %p32, %s34, %s25
      %p36 = scmp.ge.s32.totalorder %s35, 1
      %s37 = scalar_select %p36, 0, %s35
      %s38 = ssub.s32 %s26, %s33
      %s39 = ssub.s32 %s25, %s37
      %s40 = sor.u32 %s38, %s39
      %p41 = scmp.eq.s32.totalorder %s40, 0
      %s43 = sadd.s32 %s42, 1
      %s44 = scalar_select %p41, %s42, %s43
      %p47 = pneg %p41
      %p48 = scmp.eq.s32.totalorder %s18, 1
      %p49 = por %p47, %p48
      %p50 = scmp.ne.s32.totalorder %s42, %s45
      %p51 = scmp.eq.s32.totalorder %s18, 0
      %p52 = por %p50, %p51
      %p53 = scmp.ne.s32.totalorder %s42, %s45
      %p54 = scmp.eq.s32.totalorder %s23, 1
      %p55 = por %p53, %p54
      %p56 = scmp.ne.s32.totalorder %s45, %s46
      %p57 = scmp.eq.s32.totalorder %s23, 0
      %p58 = por %p56, %p57
      %p59 = scmp.ne.s32.totalorder %s45, %s46
      %p60 = scmp.eq.s32.totalorder %s24, 1
      %p61 = por %p59, %p60
      %p63 = scmp.ne.s32.totalorder %s46, %s62
      %p64 = scmp.eq.s32.totalorder %s24, 0
      %p65 = por %p63, %p64
      %s66 = ssub.s32 %s26, %s33
      %s67 = ssub.s32 %s25, %s37
      %s68 = sor.u32 %s66, %s67
      %p69 = scmp.eq.s32.totalorder %s68, 0
      %s71 = sadd.s32 %s70, 1
      %s72 = scalar_select %p69, %s70, %s71
      %p75 = pneg %p69
      %p76 = scmp.eq.s32.totalorder %s18, 1
      %p77 = por %p75, %p76
      %p78 = scmp.ne.s32.totalorder %s70, %s73
      %p79 = scmp.eq.s32.totalorder %s18, 0
      %p80 = por %p78, %p79
      %p81 = scmp.ne.s32.totalorder %s70, %s73
      %p82 = scmp.eq.s32.totalorder %s23, 1
      %p83 = por %p81, %p82
      %p84 = scmp.ne.s32.totalorder %s73, %s74
      %p85 = scmp.eq.s32.totalorder %s23, 0
      %p86 = por %p84, %p85
      %p87 = scmp.ne.s32.totalorder %s73, %s74
      %p88 = scmp.eq.s32.totalorder %s24, 1
      %p89 = por %p87, %p88
      %p91 = scmp.ne.s32.totalorder %s74, %s90
      %p92 = scmp.eq.s32.totalorder %s24, 0
      %p93 = por %p91, %p92
      %s95 = sadd.s32 %s94, 1
      %p98 = scmp.eq.s32.totalorder %s18, 1
      %p99 = scmp.ne.s32.totalorder %s94, %s96
      %p100 = scmp.eq.s32.totalorder %s18, 0
      %p101 = por %p99, %p100
      %p102 = scmp.ne.s32.totalorder %s94, %s96
      %p103 = scmp.eq.s32.totalorder %s23, 1
      %p104 = por %p102, %p103
      %p105 = scmp.ne.s32.totalorder %s96, %s97
      %p106 = scmp.eq.s32.totalorder %s23, 0
      %p107 = por %p105, %p106
      %p108 = scmp.ne.s32.totalorder %s96, %s97
      %p109 = scmp.eq.s32.totalorder %s24, 1
      %p110 = por %p108, %p109
      %p112 = scmp.ne.s32.totalorder %s97, %s111
      %p113 = scmp.eq.s32.totalorder %s24, 0
      %p114 = por %p112, %p113
      %s116 = sadd.s32 %s115, 1
      %p119 = scmp.eq.s32.totalorder %s18, 1
      %p120 = scmp.ne.s32.totalorder %s115, %s117
      %p121 = scmp.eq.s32.totalorder %s18, 0
      %p122 = por %p120, %p121
      %p123 = scmp.ne.s32.totalorder %s115, %s117
      %p124 = scmp.eq.s32.totalorder %s23, 1
      %p125 = por %p123, %p124
      %p126 = scmp.ne.s32.totalorder %s117, %s118
      %p127 = scmp.eq.s32.totalorder %s23, 0
      %p128 = por %p126, %p127
      %p129 = scmp.ne.s32.totalorder %s117, %s118
      %p130 = scmp.eq.s32.totalorder %s24, 1
      %p131 = por %p129, %p130
      %p133 = scmp.ne.s32.totalorder %s118, %s132
      %p134 = scmp.eq.s32.totalorder %s24, 0
      %p135 = por %p133, %p134
      %s137 = sadd.s32 %s136, 1
      %p140 = scmp.eq.s32.totalorder %s18, 1
      %p141 = scmp.ne.s32.totalorder %s136, %s138
      %p142 = scmp.eq.s32.totalorder %s18, 0
      %p143 = por %p141, %p142
      %p144 = scmp.ne.s32.totalorder %s136, %s138
      %p145 = scmp.eq.s32.totalorder %s23, 1
      %p146 = por %p144, %p145
      %p147 = scmp.ne.s32.totalorder %s138, %s139
      %p148 = scmp.eq.s32.totalorder %s23, 0
      %p149 = por %p147, %p148
      %p150 = scmp.ne.s32.totalorder %s138, %s139
      %p151 = scmp.eq.s32.totalorder %s24, 1
      %p152 = por %p150, %p151
      %p154 = scmp.ne.s32.totalorder %s139, %s153
      %p155 = scmp.eq.s32.totalorder %s24, 0
      %p156 = por %p154, %p155
      %s158 = sadd.s32 %s157, 1
      %p161 = scmp.eq.s32.totalorder %s18, 1
      %p162 = scmp.ne.s32.totalorder %s157, %s159
      %p163 = scmp.eq.s32.totalorder %s18, 0
      %p164 = por %p162, %p163
      %p165 = scmp.ne.s32.totalorder %s157, %s159
      %p166 = scmp.eq.s32.totalorder %s23, 1
      %p167 = por %p165, %p166
      %p168 = scmp.ne.s32.totalorder %s159, %s160
      %p169 = scmp.eq.s32.totalorder %s23, 0
      %p170 = por %p168, %p169
      %p171 = scmp.ne.s32.totalorder %s159, %s160
      %p172 = scmp.eq.s32.totalorder %s24, 1
      %p173 = por %p171, %p172
      %p175 = scmp.ne.s32.totalorder %s160, %s174
      %p176 = scmp.eq.s32.totalorder %s24, 0
      %p177 = por %p175, %p176
      %s178 = ssub.s32 %s26, %s33
      %s179 = ssub.s32 %s25, %s37
      %s180 = sor.u32 %s178, %s179
      %p181 = scmp.eq.s32.totalorder %s180, 0
      %s183 = sadd.s32 %s182, 1
      %s184 = scalar_select %p181, %s182, %s183
      %p187 = pneg %p181
      %p188 = scmp.eq.s32.totalorder %s18, 1
      %p189 = por %p187, %p188
      %p190 = scmp.ne.s32.totalorder %s182, %s185
      %p191 = scmp.eq.s32.totalorder %s18, 0
      %p192 = por %p190, %p191
      %p193 = scmp.ne.s32.totalorder %s182, %s185
      %p194 = scmp.eq.s32.totalorder %s23, 1
      %p195 = por %p193, %p194
      %p196 = scmp.ne.s32.totalorder %s185, %s186
      %p197 = scmp.eq.s32.totalorder %s23, 0
      %p198 = por %p196, %p197
      %p199 = scmp.ne.s32.totalorder %s185, %s186
      %p200 = scmp.eq.s32.totalorder %s24, 1
      %p201 = por %p199, %p200
      %p203 = scmp.ne.s32.totalorder %s186, %s202
      %p204 = scmp.eq.s32.totalorder %s24, 0
      %p205 = por %p203, %p204
      %p206 = scmp.le.s32.totalorder 1, %s18
      %p207 = scmp.lt.s32.totalorder %s18, 3
      %p208 = pnand %p206, %p207
      %p209 = pneg %p208
      // Predicated region
      $region9: #{tpu_custom_call.1} parent=5 // pred_check
        _
      $region10: #{tpu_custom_call.1} parent=5 // pred_check_branch
        %211 = sbr.rel (%p208) target = $region12
      $region11: #{tpu_custom_call.1} parent=5 // pred_region
        %s212 = ssub.s32 %s18, 1
        // Predicated region
        $region13: #{tpu_custom_call.1} parent=11 // pred_check
          %p213 = pneg %p107
        $region14: #{tpu_custom_call.1} parent=11 // pred_check_branch
          %215 = sbr.rel (%p213) target = $region16
        $region15: #{tpu_custom_call.1} parent=11 // pred_region
          _
        $region16: #{tpu_custom_call.1} parent=11 // pred_fallthru
          _
        // Predicated region
        $region17: #{tpu_custom_call.1} parent=11 // pred_check
          %p216 = pneg %p128
        $region18: #{tpu_custom_call.1} parent=11 // pred_check_branch
          %218 = sbr.rel (%p216) target = $region20
        $region19: #{tpu_custom_call.1} parent=11 // pred_region
          _
        $region20: #{tpu_custom_call.1} parent=11 // pred_fallthru
          _
        // Predicated region
        $region21: #{tpu_custom_call.1} parent=11 // pred_check
          %p219 = pneg %p149
        $region22: #{tpu_custom_call.1} parent=11 // pred_check_branch
          %221 = sbr.rel (%p219) target = $region24
        $region23: #{tpu_custom_call.1} parent=11 // pred_region
          _
        $region24: #{tpu_custom_call.1} parent=11 // pred_fallthru
          _
        // Predicated region
        $region25: #{tpu_custom_call.1} parent=11 // pred_check
          %p222 = pneg %p170
        $region26: #{tpu_custom_call.1} parent=11 // pred_check_branch
          %224 = sbr.rel (%p222) target = $region28
        $region27: #{tpu_custom_call.1} parent=11 // pred_region
          _
        $region28: #{tpu_custom_call.1} parent=11 // pred_fallthru
          _
      $region12: #{tpu_custom_call.1} parent=5 // pred_fallthru
        _
      %p225 = scmp.lt.s32.totalorder %s18, 2
      // Predicated region
      $region29: #{tpu_custom_call.1} parent=5 // pred_check
        %p226 = pneg %p225
      $region30: #{tpu_custom_call.1} parent=5 // pred_check_branch
        %228 = sbr.rel (%p226) target = $region32
      $region31: #{tpu_custom_call.1} parent=5 // pred_region
        // Predicated region
        $region33: #{tpu_custom_call.1} parent=31 // pred_check
          %p229 = pneg %p52
        $region34: #{tpu_custom_call.1} parent=31 // pred_check_branch
          %231 = sbr.rel (%p229) target = $region36
        $region35: #{tpu_custom_call.1} parent=31 // pred_region
          %p232 = scmp.lt.s32.totalorder %s26, 1
          %s233 = scalar_select %p232, %s26, 1
          %p234 = scmp.lt.s32.totalorder %s25, 0
          %s235 = scalar_select %p234, %s25, 0
          %s236 = sadd.s32 %s235, %s233
          %s237 = smul.addr %s236, 4
          %s238 = scalar_lea.vmem %s0, %s237
        $region36: #{tpu_custom_call.1} parent=31 // pred_fallthru
          _
        // Predicated region
        $region37: #{tpu_custom_call.1} parent=31 // pred_check
          %p239 = pneg %p80
        $region38: #{tpu_custom_call.1} parent=31 // pred_check_branch
          %241 = sbr.rel (%p239) target = $region40
        $region39: #{tpu_custom_call.1} parent=31 // pred_region
          %s242 = sand.u32 %s70, 1
          %s243 = scalar_lea.sflag [#allocation3], %s242
          %s244 = sand.u32 %s70, 1
          %s245 = smul.addr %s244, 4
          %s246 = scalar_lea.vmem [#allocation2], %s245
          %s248 = ssub.s32 64, 64
          %249 = vsyncadd %s243, %s248
          %s250 = sadd.s32 %s25, %s26
          %s251 = smul.addr %s250, 64
          %s252 = scalar_lea.hbm %s1, %s251
          %s254 = sshll.u32 %s246, 4
          %s255 = int_to_ptr.vmem [resolvable:$true] %s254
          %257 = dma.hbm_to_vmem [thread:$0]  %s252, 64, %s255, %s243
        $region40: #{tpu_custom_call.1} parent=31 // pred_fallthru
          _
      $region32: #{tpu_custom_call.1} parent=5 // pred_fallthru
        _
      %p258 = scmp.le.s32.totalorder 1, %s18
      %p259 = scmp.lt.s32.totalorder %s18, 3
      %p260 = pnand %p258, %p259
      %p261 = pneg %p260
      // Predicated region
      $region41: #{tpu_custom_call.1} parent=5 // pred_check
        _
      $region42: #{tpu_custom_call.1} parent=5 // pred_check_branch
        %263 = sbr.rel (%p260) target = $region44
      $region43: #{tpu_custom_call.1} parent=5 // pred_region
        %s264 = ssub.s32 %s18, 1
        %s265 = sand.u32 %s73, 1
        %s266 = scalar_lea.sflag [#allocation3], %s265
        %s267 = sand.u32 %s73, 1
        %s268 = smul.addr %s267, 4
        %s269 = scalar_lea.vmem [#allocation2], %s268
        // Predicated region
        $region45: #{tpu_custom_call.1} parent=43 // pred_check
          %p270 = pneg %p86
        $region46: #{tpu_custom_call.1} parent=43 // pred_check_branch
          %272 = sbr.rel (%p270) target = $region48
        $region47: #{tpu_custom_call.1} parent=43 // pred_region
          %273 = dma.done %s266, 64
        $region48: #{tpu_custom_call.1} parent=43 // pred_fallthru
          _
        %p274 = scmp.lt.s32.totalorder %s28, 1
        %s275 = scalar_select %p274, %s28, 1
        %p276 = scmp.lt.s32.totalorder %s27, 0
        %s277 = scalar_select %p276, %s27, 0
        %s278 = sadd.s32 %s277, %s275
        %s279 = smul.addr %s278, 4
        %s280 = scalar_lea.vmem %s0, %s279
        %p281 = pneg %p58
        %p282 = pneg %p55
        %s283 = sand.u32 %s73, 1
        %s284 = scalar_lea.sflag [#allocation3], %s283
        %s285 = sand.u32 %s73, 1
        %s286 = smul.addr %s285, 4
        %s287 = scalar_lea.vmem [#allocation2], %s286
        %p288 = pneg %p86
        %p289 = pneg %p83
        %p290 = pneg %p107
        %p291 = pneg %p104
        %p292 = pneg %p128
        %p293 = pneg %p125
        %p294 = pneg %p149
        %p295 = pneg %p146
        %p296 = pneg %p170
        %p297 = pneg %p167
        %p298 = pneg %p198
        %p299 = pneg %p195
        %s300 = sand.u32 %s185, 1
        %s301 = scalar_lea.sflag [#allocation4], %s300
        %s302 = sand.u32 %s185, 1
        %s303 = smul.addr %s302, 4
        %s304 = scalar_lea.vmem [#allocation5], %s303
        %p305 = scmp.lt.s32.totalorder %s28, 1
        %s306 = scalar_select %p305, %s28, 1
        %p307 = scmp.lt.s32.totalorder %s27, 0
        %s308 = scalar_select %p307, %s27, 0
        %s309 = sadd.s32 %s308, %s306
        %s310 = smul.addr %s309, 4
        %s311 = scalar_lea.vmem %s0, %s310
        %s312 = smul.u32 %s27, 16
        %v313 = vld [vmem:[%s311] sm:$0xf]
        %v314 = vld [vmem:[%s269] sm:$0xf]
        %316 = vrot.lane.b32.xlu0 %v313, 4
        %v317 = vpop.permute.xlu0 %316
        %320 = vrot.lane.b32.xlu0 %v314, 16
        %v321 = vpop.permute.xlu0 %320
        %vm323 = vcmask 31744
        %v324 = vsel %vm323, %v314, %v317
        %vm325 = vcmask 162816
        %v326 = vsel %vm325, %v324, %v321
        %vm327 = vcmp.gt.f32.partialorder %v326, 0.0
        %v328 = vmul.f32 %v326, 0.1
        %v329 = vsel %vm327, %v326, %v328
        %v331 = vrot.slane %v329, 4
        %332 = vrot.lane.b32.xlu0 %v331, 127
        %v333 = vpop.permute.xlu0 %332
        %335 = vrot.lane.b32.xlu0 %v329, 126
        %v336 = vpop.permute.xlu0 %335
        %vm337 = vcmask 1043456
        %v338 = vsel %vm337, %v329, %v333
        %v339 = vld [vmem:[%s3] sm:$0xf]
        %341 = vset.pattern.permute.xlu0 0
        %342 = vperm.xlu0 %341, %v339
        %v343 = vpop.permute.xlu0 %342
        %v345 = vadd.f32 %v326, %v343
        %v346 = vld [vmem:[%s2] sm:$0xf]
        %vm347 = vcmask 97280
        %v349 = vsel %vm347, %v346, 0
        %v351 = vsel %vm337, %v336, 0
        %353 = vmatprep.subr.mxu0 0.0
        %354 = vmatpush1.msra.mxu0 %v338
        %355 = vmatprep.subr.mxu0 0.0
        %356 = vmatpush1.msra.mxu0 %v351
        %357 = vmatprep.subr.mxu0 0.0
        %358 = vmatpush1.msra.mxu0 0.0
        %359 = vmatprep.subr.mxu0 0.0
        %360 = vmatpush1.msra.mxu0 0.0
        %361 = vmatprep.subr.mxu0 0.0
        %362 = vmatpush1.msra.mxu0 0.0
        %363 = vmatprep.subr.mxu0 0.0
        %364 = vmatpush1.msra.mxu0 0.0
        %365 = vmatprep.subr.mxu0 0.0
        %366 = vmatpush1.msra.mxu0 0.0
        %367 = vmatprep.subr.mxu0 0.0
        %368 = vmatpush1.msra.mxu0 0.0
        %369 = vmatprep.subr.mxu0 0.0
        %370 = vmatpush1.msra.mxu0 0.0
        %371 = vmatprep.subr.mxu0 0.0
        %372 = vmatpush1.msra.mxu0 0.0
        %373 = vmatprep.subr.mxu0 0.0
        %374 = vmatpush1.msra.mxu0 0.0
        %375 = vmatprep.subr.mxu0 0.0
        %376 = vmatpush1.msra.mxu0 0.0
        %377 = vmatprep.subr.mxu0 0.0
        %378 = vmatpush1.msra.mxu0 0.0
        %379 = vmatprep.subr.mxu0 0.0
        %380 = vmatpush1.msra.mxu0 0.0
        %381 = vmatprep.subr.mxu0 0.0
        %382 = vmatpush1.msra.mxu0 0.0
        %383 = vmatprep.subr.mxu0 0.0
        %384 = vmatpush1.msra.mxu0 0.0
        %385 = vmatprep.subr.mxu0 0.0
        %386 = vmatpush1.msra.mxu0 0.0
        %387 = vmatprep.subr.mxu0 0.0
        %388 = vmatpush1.msra.mxu0 0.0
        %389 = vmatprep.subr.mxu0 0.0
        %390 = vmatpush1.msra.mxu0 0.0
        %391 = vmatprep.subr.mxu0 0.0
        %392 = vmatpush1.msra.mxu0 0.0
        %393 = vmatprep.subr.mxu0 0.0
        %394 = vmatpush1.msra.mxu0 0.0
        %395 = vmatprep.subr.mxu0 0.0
        %396 = vmatpush1.msra.mxu0 0.0
        %397 = vmatprep.subr.mxu0 0.0
        %398 = vmatpush1.msra.mxu0 0.0
        %399 = vmatprep.subr.mxu0 0.0
        %400 = vmatpush1.msra.mxu0 0.0
        %401 = vmatprep.subr.mxu0 0.0
        %402 = vmatpush1.msra.mxu0 0.0
        %403 = vmatprep.subr.mxu0 0.0
        %404 = vmatpush1.msra.mxu0 0.0
        %405 = vmatprep.subr.mxu0 0.0
        %406 = vmatpush1.msra.mxu0 0.0
        %407 = vmatprep.subr.mxu0 0.0
        %408 = vmatpush1.msra.mxu0 0.0
        %409 = vmatprep.subr.mxu0 0.0
        %410 = vmatpush1.msra.mxu0 0.0
        %411 = vmatprep.subr.mxu0 0.0
        %412 = vmatpush1.msra.mxu0 0.0
        %413 = vmatprep.subr.mxu0 0.0
        %414 = vmatpush1.msra.mxu0 0.0
        %415 = vmatprep.subr.mxu0 0.0
        %416 = vmatpush1.msra.mxu0 0.0
        %417 = vmatprep.mubr.f32.mxu0 0.0
        %418 = vmatmul.mubr.f32.gmra.mrb[0].mxu0 %v349
        %v419 = vpop.f32.mrb[0].mxu0
        %v420 = vadd.f32 0.0, %v419
        %v421 = vpop.f32.mrb[0].mxu0
        %422 = vdwg.mxu0
        %424 = vrot.lane.b32.xlu0 %v420, 1
        %v425 = vpop.permute.xlu0 %424
        %v427 = vadd.f32 %v345, %v425
        %s428 = ssub.s32 %s312, 3
        %v429 = vlaneseq
        %v430 = vand.u32 %v429, 127
        %v431 = vstv %s428
        %v432 = vadd.s32 %v431, %v430
        %vm433 = vcmp.ge.s32.totalorder %v432, 0
        %vm434 = vcmp.lt.s32.totalorder %v432, 16
        %vm435 = vmand %vm433, %vm434
        %v436 = vsel %vm435, 1, 0
        %vm437 = vcmp.eq.s32.totalorder %v436, 1
        %439 = vrot.lane.b32.xlu0 %v427, 127
        %v440 = vpop.permute.xlu0 %439
        %v442 = vsel %vm437, %v440, 0.0
        %vm443 = vcmp.gt.f32.partialorder %v442, 0.0
        %v444 = vmul.f32 %v442, 0.1
        %v445 = vsel %vm443, %v442, %v444
        %v447 = vrot.slane %v445, 4
        %448 = vrot.lane.b32.xlu0 %v447, 125
        %v449 = vpop.permute.xlu0 %448
        %451 = vrot.lane.b32.xlu0 %v445, 122
        %v452 = vpop.permute.xlu0 %451
        %v453 = vsel %vm337, %v445, %v449
        %v454 = vld [vmem:[%s5] sm:$0xf]
        %456 = vset.pattern.permute.xlu0 0
        %457 = vperm.xlu0 %456, %v454
        %v458 = vpop.permute.xlu0 %457
        %v460 = vadd.f32 %v442, %v458
        %v461 = vld [vmem:[%s4] sm:$0xf]
        %v463 = vsel %vm347, %v461, 0
        %v465 = vsel %vm337, %v452, 0
        %467 = vmatprep.subr.mxu0 0.0
        %468 = vmatpush1.msra.mxu0 %v453
        %469 = vmatprep.subr.mxu0 0.0
        %470 = vmatpush1.msra.mxu0 %v465
        %471 = vmatprep.subr.mxu0 0.0
        %472 = vmatpush1.msra.mxu0 0.0
        %473 = vmatprep.subr.mxu0 0.0
        %474 = vmatpush1.msra.mxu0 0.0
        %475 = vmatprep.subr.mxu0 0.0
        %476 = vmatpush1.msra.mxu0 0.0
        %477 = vmatprep.subr.mxu0 0.0
        %478 = vmatpush1.msra.mxu0 0.0
        %479 = vmatprep.subr.mxu0 0.0
        %480 = vmatpush1.msra.mxu0 0.0
        %481 = vmatprep.subr.mxu0 0.0
        %482 = vmatpush1.msra.mxu0 0.0
        %483 = vmatprep.subr.mxu0 0.0
        %484 = vmatpush1.msra.mxu0 0.0
        %485 = vmatprep.subr.mxu0 0.0
        %486 = vmatpush1.msra.mxu0 0.0
        %487 = vmatprep.subr.mxu0 0.0
        %488 = vmatpush1.msra.mxu0 0.0
        %489 = vmatprep.subr.mxu0 0.0
        %490 = vmatpush1.msra.mxu0 0.0
        %491 = vmatprep.subr.mxu0 0.0
        %492 = vmatpush1.msra.mxu0 0.0
        %493 = vmatprep.subr.mxu0 0.0
        %494 = vmatpush1.msra.mxu0 0.0
        %495 = vmatprep.subr.mxu0 0.0
        %496 = vmatpush1.msra.mxu0 0.0
        %497 = vmatprep.subr.mxu0 0.0
        %498 = vmatpush1.msra.mxu0 0.0
        %499 = vmatprep.subr.mxu0 0.0
        %500 = vmatpush1.msra.mxu0 0.0
        %501 = vmatprep.subr.mxu0 0.0
        %502 = vmatpush1.msra.mxu0 0.0
        %503 = vmatprep.subr.mxu0 0.0
        %504 = vmatpush1.msra.mxu0 0.0
        %505 = vmatprep.subr.mxu0 0.0
        %506 = vmatpush1.msra.mxu0 0.0
        %507 = vmatprep.subr.mxu0 0.0
        %508 = vmatpush1.msra.mxu0 0.0
        %509 = vmatprep.subr.mxu0 0.0
        %510 = vmatpush1.msra.mxu0 0.0
        %511 = vmatprep.subr.mxu0 0.0
        %512 = vmatpush1.msra.mxu0 0.0
        %513 = vmatprep.subr.mxu0 0.0
        %514 = vmatpush1.msra.mxu0 0.0
        %515 = vmatprep.subr.mxu0 0.0
        %516 = vmatpush1.msra.mxu0 0.0
        %517 = vmatprep.subr.mxu0 0.0
        %518 = vmatpush1.msra.mxu0 0.0
        %519 = vmatprep.subr.mxu0 0.0
        %520 = vmatpush1.msra.mxu0 0.0
        %521 = vmatprep.subr.mxu0 0.0
        %522 = vmatpush1.msra.mxu0 0.0
        %523 = vmatprep.subr.mxu0 0.0
        %524 = vmatpush1.msra.mxu0 0.0
        %525 = vmatprep.subr.mxu0 0.0
        %526 = vmatpush1.msra.mxu0 0.0
        %527 = vmatprep.subr.mxu0 0.0
        %528 = vmatpush1.msra.mxu0 0.0
        %529 = vmatprep.subr.mxu0 0.0
        %530 = vmatpush1.msra.mxu0 0.0
        %531 = vmatprep.mubr.f32.mxu0 0.0
        %532 = vmatmul.mubr.f32.gmra.mrb[0].mxu0 %v463
        %v533 = vpop.f32.mrb[0].mxu0
        %v534 = vadd.f32 0.0, %v533
        %v535 = vpop.f32.mrb[0].mxu0
        %536 = vdwg.mxu0
        %538 = vrot.lane.b32.xlu0 %v534, 3
        %v539 = vpop.permute.xlu0 %538
        %v541 = vadd.f32 %v460, %v539
        %543 = vrot.lane.b32.xlu0 %v541, 125
        %v544 = vpop.permute.xlu0 %543
        %vm546 = vcmask 125952
        %547 = vst.msk [vmem:[%s304] sm:$0xf] %vm546, %v544
        %s548 = sand.u32 %s185, 1
        %s549 = scalar_lea.sflag [#allocation4], %s548
        %s550 = sand.u32 %s185, 1
        %s551 = smul.addr %s550, 4
        %s552 = scalar_lea.vmem [#allocation5], %s551
        // Predicated region
        $region49: #{tpu_custom_call.1} parent=43 // pred_check
          %p553 = pneg %p195
        $region50: #{tpu_custom_call.1} parent=43 // pred_check_branch
          %555 = sbr.rel (%p553) target = $region52
        $region51: #{tpu_custom_call.1} parent=43 // pred_region
          %s557 = ssub.s32 64, 64
          %558 = vsyncadd %s549, %s557
          %s559 = sadd.s32 %s27, %s28
          %s560 = smul.addr %s559, 64
          %s561 = scalar_lea.hbm %s6, %s560
          %s563 = sshll.u32 %s552, 4
          %s564 = int_to_ptr.vmem [resolvable:$true] %s563
          %566 = dma.vmem_to_hbm [thread:$0]  %s564, 64, %s561, %s549
        $region52: #{tpu_custom_call.1} parent=43 // pred_fallthru
          _
      $region44: #{tpu_custom_call.1} parent=5 // pred_fallthru
        _
      %p567 = scmp.le.s32.totalorder 2, %s18
      // Predicated region
      $region53: #{tpu_custom_call.1} parent=5 // pred_check
        %p568 = pneg %p567
      $region54: #{tpu_custom_call.1} parent=5 // pred_check_branch
        %570 = sbr.rel (%p568) target = $region56
      $region55: #{tpu_custom_call.1} parent=5 // pred_region
        %s571 = ssub.s32 %s18, 2
        // Predicated region
        $region57: #{tpu_custom_call.1} parent=55 // pred_check
          %p572 = pneg %p201
        $region58: #{tpu_custom_call.1} parent=55 // pred_check_branch
          %574 = sbr.rel (%p572) target = $region60
        $region59: #{tpu_custom_call.1} parent=55 // pred_region
          %s575 = sand.u32 %s186, 1
          %s576 = scalar_lea.sflag [#allocation4], %s575
          %s577 = sand.u32 %s186, 1
          %s578 = smul.addr %s577, 4
          %s579 = scalar_lea.vmem [#allocation5], %s578
          %580 = dma.done %s576, 64
        $region60: #{tpu_custom_call.1} parent=55 // pred_fallthru
          _
      $region56: #{tpu_custom_call.1} parent=5 // pred_fallthru
        _
    $region6: #{tpu_custom_call.1} parent=1 // loop_footer
      %s22 = sadd.s32 1, %s18
    $region7: #{tpu_custom_call.1} parent=1 // loop_footer_branch
      %17 = sbr.rel target = $region3
    $region8: #{tpu_custom_call.1} parent=1 // loop_exit
      _
    %581 = vsyncpa [#allocation3], 1
    %s582 = scalar_lea.sflag [#allocation3], 1
    %583 = vsyncpa %s582, 1
    %584 = vsyncpa [#allocation4], 1
    %s585 = scalar_lea.sflag [#allocation4], 1
    %586 = vsyncpa %s585, 1

</llo_original>
